<compile_context>
chip_gen: v7x
topology: tpu7x:2x2x1
jax: 0.10.0
libtpu: 0.0.40
codegen_flags: <defaults>
</compile_context>

<pallas_src>
import functools

import jax
import jax.numpy as jnp
from jax.experimental import pallas as pl
from jax.experimental.pallas import tpu as pltpu


ROW_W = 128   # packed per-row input slab width
OUT_W = 128   # packed output slab width: [recon | mu | logvar | 0-pad]
ACT_W = 128   # packed encoder/decoder activation slab width

# lane offsets inside the per-row input slab
PC0_OFF = 0    # pcs[:, 0, :]   (3 lanes)
CPT_OFF = 8    # contact_point  (3 lanes)
TASK_OFF = 16  # task           (1 lane)
EPS_OFF = 24   # reparam noise  (z_dim lanes); traj follows at EPS_OFF + ceil8(z_dim)


def _round_up(x, m):
    return ((x + m - 1) // m) * m


# ----------------------------------------------------------------------------
# Fused forward kernel (one invocation per row tile of the batch)
# ----------------------------------------------------------------------------
def _fused_forward_kernel(row_ref, w_ref, out_ref, act_ref, *,
                          layout, feat, task_feat, cp_feat, traj_z, z_dim,
                          ns6, traj_off, seg1, seg2, seg3):
    f32 = jnp.float32
    dot = lambda a, b: jnp.dot(a, b, preferred_element_type=f32)
    relu = lambda v: jnp.maximum(v, 0.0)

    def mat(name):                        # full weight matrix view from the slab
        r0, rows, cols = layout[name]
        return w_ref[r0:r0 + rows, 0:cols]

    def vec(name):                        # (1, cols) bias row
        r0, _, cols = layout[name]
        return w_ref[r0:r0 + 1, 0:cols]

    def blk8(name):                       # aligned 8-row block (tiny K<=3 weights)
        r0, _, cols = layout[name]
        return w_ref[r0:r0 + 8, 0:cols]

    row = row_ref[...]                                            # one (TM,128) load
    px = row[:, PC0_OFF:PC0_OFF + 1]
    py = row[:, PC0_OFF + 1:PC0_OFF + 2]
    pz = row[:, PC0_OFF + 2:PC0_OFF + 3]
    cx = row[:, CPT_OFF:CPT_OFF + 1]
    cy = row[:, CPT_OFF + 1:CPT_OFF + 2]
    cz = row[:, CPT_OFF + 2:CPT_OFF + 3]
    tsk = row[:, TASK_OFF:TASK_OFF + 1]
    eps = row[:, EPS_OFF:EPS_OFF + z_dim]
    traj = row[:, traj_off:traj_off + ns6]

    # --- PointNet++ stand-in, evaluated only at point 0 (only whole_feats[:,:,0]
    #     is consumed). pcs.repeat(1,1,2) is already folded into the weight.
    #     K=3 first layer on the VPU; second layer on the MXU.
    # TODO(synk): full PointNet++ set-abstraction/feature-propagation hierarchy has
    #             no compact Pallas equivalent; using a shared point-wise MLP.
    pnw = blk8("pn_w1")
    h = relu(px * pnw[0:1] + py * pnw[1:2] + pz * pnw[2:3] + vec("pn_b1"))
    net = dot(h, mat("pn_w2")) + vec("pn_b2")                     # (TM, feat)

    # --- mlp_cp (K=3) / mlp_task (K=1): VPU broadcast-FMA, no MXU pass ---
    cpw = blk8("cp_w")
    f_ctpt = cx * cpw[0:1] + cy * cpw[1:2] + cz * cpw[2:3] + vec("cp_b")
    f_task = tsk * blk8("task_w")[0:1] + vec("task_b")

    # --- traj_encoder ---
    t = relu(dot(traj, mat("te_w1")) + vec("te_b1"))
    t = relu(dot(t, mat("te_w2")) + vec("te_b2"))
    z_traj = dot(t, mat("te_w3")) + vec("te_b3")                  # (TM, traj_z)

    # --- pack [z | net | f_task | f_ctpt] into a lane-dense activation slab;
    #     encoder / decoder first layers become ONE K=128 matmul each
    #     (weight rows were repositioned to the same lane offsets in the wrapper).
    act_ref[...] = jnp.zeros_like(act_ref)
    act_ref[:, seg1:seg1 + feat] = net
    act_ref[:, seg2:seg2 + task_feat] = f_task
    act_ref[:, seg3:seg3 + cp_feat] = f_ctpt
    act_ref[:, 0:traj_z] = z_traj

    h1 = relu(dot(act_ref[...], mat("ae_w1")) + vec("ae_b1"))
    h2 = relu(dot(h1, mat("ae_w2")) + vec("ae_b2"))

    # --- fused (mu | logvar) head; columns pre-positioned at output lanes
    #     [ns6 : ns6+2Z] so it lands directly in the packed output slab.
    head = dot(h2, mat("head_w")) + vec("head_b")                 # (TM, OUT_W)
    mu = head[:, ns6:ns6 + z_dim]
    logvar = head[:, ns6 + z_dim:ns6 + 2 * z_dim]
    z_all = mu + eps * jnp.exp(0.5 * logvar)

    # --- decoder: reuse the activation slab, overwrite only the z segment.
    #     (weight rows outside the written segments are zero, so any stale lanes
    #      contribute nothing.)
    act_ref[:, 0:z_dim] = z_all
    d = relu(dot(act_ref[...], mat("de_w1")) + vec("de_b1"))
    d = relu(dot(d, mat("de_w2")) + vec("de_b2"))
    recon = dot(d, mat("de_w3")) + vec("de_b3")                   # (TM, OUT_W), lanes [0:ns6]

    # recon occupies lanes [0:ns6], head occupies [ns6:ns6+2Z], zeros elsewhere:
    # a single VPU add and one unmasked (TM,128) store.
    out_ref[...] = (recon + head).astype(out_ref.dtype)


# ----------------------------------------------------------------------------
# Deterministic parameter init (PyTorch nn.Linear default: U(-1/sqrt(fan_in), ..))
# ----------------------------------------------------------------------------
def init_linear(key, fan_in, fan_out):
    kw, kb = jax.random.split(key)
    lim = 1.0 / jnp.sqrt(jnp.float32(fan_in))
    w = jax.random.uniform(kw, (fan_in, fan_out), jnp.float32, -lim, lim)
    b = jax.random.uniform(kb, (fan_out,), jnp.float32, -lim, lim)
    return w, b


def build_params(key, feat_dim, traj_z_dim, z_dim, cp_feat, task_feat, hidden,
                 num_steps):
    keys = jax.random.split(key, 16)
    p = {}
    # pointnet2 stand-in: shared per-point MLP  6 -> feat_dim -> feat_dim
    p["pn_w1"], p["pn_b1"] = init_linear(keys[0], 6, feat_dim)
    p["pn_w2"], p["pn_b2"] = init_linear(keys[1], feat_dim, feat_dim)
    # mlp_cp : 3 -> cp_feat ; mlp_task : 1 -> task_feat
    p["cp_w"], p["cp_b"] = init_linear(keys[2], 3, cp_feat)
    p["task_w"], p["task_b"] = init_linear(keys[3], 1, task_feat)
    # traj_encoder (ActorEncoder): num_steps*6 -> 128 -> 128 -> traj_z_dim
    p["te_w1"], p["te_b1"] = init_linear(keys[4], num_steps * 6, 128)
    p["te_w2"], p["te_b2"] = init_linear(keys[5], 128, 128)
    p["te_w3"], p["te_b3"] = init_linear(keys[6], 128, traj_z_dim)
    # all_encoder: concat(z_traj, net, f_task, f_ctpt) -> hidden -> hidden -> (mu, logvar)
    enc_in = traj_z_dim + feat_dim + task_feat + cp_feat
    p["ae_w1"], p["ae_b1"] = init_linear(keys[7], enc_in, hidden)
    p["ae_w2"], p["ae_b2"] = init_linear(keys[8], hidden, hidden)
    p["mu_w"], p["mu_b"] = init_linear(keys[9], hidden, z_dim)
    p["lv_w"], p["lv_b"] = init_linear(keys[10], hidden, z_dim)
    # decoder: concat(z_all, net, f_task, f_ctpt) -> hidden -> hidden -> num_steps*6
    dec_in = z_dim + feat_dim + task_feat + cp_feat
    p["de_w1"], p["de_b1"] = init_linear(keys[11], dec_in, hidden)
    p["de_w2"], p["de_b2"] = init_linear(keys[12], hidden, hidden)
    p["de_w3"], p["de_b3"] = init_linear(keys[13], hidden, num_steps * 6)
    return p


# ----------------------------------------------------------------------------
# One-time weight packing (hoisted out of the hot jit path)
# ----------------------------------------------------------------------------
def prepare_params(params, num_steps):
    f32 = jnp.float32
    feat = params["pn_w2"].shape[1]
    cp_feat = params["cp_w"].shape[1]
    task_feat = params["task_w"].shape[1]
    traj_z = params["te_w3"].shape[1]
    z_dim = params["mu_w"].shape[1]
    hidden = params["ae_w2"].shape[1]
    ns6 = num_steps * 6

    assert ns6 + 2 * z_dim <= OUT_W, "output slab too narrow"
    traj_off = EPS_OFF + _round_up(z_dim, 8)
    assert traj_off + ns6 <= ROW_W, "input slab too narrow"

    # activation-slab lane offsets (segments padded to multiples of 8)
    seg1 = _round_up(max(traj_z, z_dim), 8)
    seg2 = seg1 + _round_up(feat, 8)
    seg3 = seg2 + _round_up(task_feat, 8)
    assert seg3 + _round_up(cp_feat, 8) <= ACT_W, "activation slab too narrow"

    # pcs.repeat(1, 1, 2): x6 @ W1 == x3 @ (W1[:3] + W1[3:]) -> fold into the weight.
    pn_w1f = params["pn_w1"][:3] + params["pn_w1"][3:]

    def reposition_rows(w, first_dim):
        # scatter concat([z, net, f_task, f_ctpt]) rows onto activation-slab offsets
        out = jnp.zeros((ACT_W, w.shape[1]), f32)
        o = 0
        out = out.at[0:first_dim].set(w[o:o + first_dim]); o += first_dim
        out = out.at[seg1:seg1 + feat].set(w[o:o + feat]); o += feat
        out = out.at[seg2:seg2 + task_feat].set(w[o:o + task_feat]); o += task_feat
        out = out.at[seg3:seg3 + cp_feat].set(w[o:o + cp_feat]); o += cp_feat
        return out

    ae_w1p = reposition_rows(params["ae_w1"], traj_z)
    de_w1p = reposition_rows(params["de_w1"], z_dim)

    # fused (mu | logvar) head, columns pre-positioned at output lanes [ns6:ns6+2Z]
    head_w = jnp.zeros((hidden, OUT_W), f32)
    head_w = head_w.at[:, ns6:ns6 + z_dim].set(params["mu_w"])
    head_w = head_w.at[:, ns6 + z_dim:ns6 + 2 * z_dim].set(params["lv_w"])
    head_b = jnp.zeros((OUT_W,), f32)
    head_b = head_b.at[ns6:ns6 + z_dim].set(params["mu_b"])
    head_b = head_b.at[ns6 + z_dim:ns6 + 2 * z_dim].set(params["lv_b"])

    # decoder output layer, columns pre-positioned at output lanes [0:ns6]
    de_w3p = jnp.zeros((hidden, OUT_W), f32)
    de_w3p = de_w3p.at[:, 0:ns6].set(params["de_w3"])
    de_b3p = jnp.zeros((OUT_W,), f32)
    de_b3p = de_b3p.at[0:ns6].set(params["de_b3"])

    tensors = {
        "pn_w1": pn_w1f, "pn_b1": params["pn_b1"],
        "pn_w2": params["pn_w2"], "pn_b2": params["pn_b2"],
        "cp_w": params["cp_w"], "cp_b": params["cp_b"],
        "task_w": params["task_w"], "task_b": params["task_b"],
        "te_w1": params["te_w1"], "te_b1": params["te_b1"],
        "te_w2": params["te_w2"], "te_b2": params["te_b2"],
        "te_w3": params["te_w3"], "te_b3": params["te_b3"],
        "ae_w1": ae_w1p, "ae_b1": params["ae_b1"],
        "ae_w2": params["ae_w2"], "ae_b2": params["ae_b2"],
        "head_w": head_w, "head_b": head_b,
        "de_w1": de_w1p, "de_b1": params["de_b1"],
        "de_w2": params["de_w2"], "de_b2": params["de_b2"],
        "de_w3": de_w3p, "de_b3": de_b3p,
    }
    order = ["pn_w1", "pn_b1", "pn_w2", "pn_b2", "cp_w", "cp_b", "task_w", "task_b",
             "te_w1", "te_b1", "te_w2", "te_b2", "te_w3", "te_b3",
             "ae_w1", "ae_b1", "ae_w2", "ae_b2", "head_w", "head_b",
             "de_w1", "de_b1", "de_w2", "de_b2", "de_w3", "de_b3"]

    # one lane-dense (rows, 128) slab; every tensor starts at an 8-row boundary
    layout = {}
    r = 0
    for name in order:
        t = tensors[name]
        t2 = t.reshape(1, -1) if t.ndim == 1 else t
        rows, cols = t2.shape
        assert cols <= 128
        layout[name] = (r, rows, cols)
        r += _round_up(rows, 8)
    total_rows = _round_up(r, 8)

    slab = jnp.zeros((total_rows, 128), f32)
    for name in order:
        t = tensors[name]
        t2 = t.reshape(1, -1) if t.ndim == 1 else t
        r0, rows, cols = layout[name]
        slab = slab.at[r0:r0 + rows, 0:cols].set(t2.astype(f32))

    dims = dict(feat=int(feat), cp_feat=int(cp_feat), task_feat=int(task_feat),
                traj_z=int(traj_z), z_dim=int(z_dim), ns6=int(ns6),
                traj_off=int(traj_off), seg1=int(seg1), seg2=int(seg2),
                seg3=int(seg3))
    return jax.device_put(slab), layout, dims


def pick_row_tile():
    # generation-aware row-tile cap: 128 on v5e, 256 on v6e/v7x
    try:
        kind = jax.devices()[0].device_kind.lower()
    except Exception:
        return 256
    return 128 if "v5" in kind else 256


# ----------------------------------------------------------------------------
# TrajProposal.forward — single fused pallas_call
# ----------------------------------------------------------------------------
def traj_proposal_forward(w_slab, pcs, task, traj, contact_point, eps, *,
                          layout, dims, num_steps, row_tile=256):
    B = pcs.shape[0]
    z_dim = dims["z_dim"]
    ns6 = dims["ns6"]
    traj_off = dims["traj_off"]

    # batch tiling: rows padded to 8-sublane tiles; tiles form a "parallel" grid axis
    tm = min(row_tile, _round_up(B, 8))
    n_tiles = pl.cdiv(_round_up(B, 8), tm)
    b_pad = n_tiles * tm

    # pack the 5 per-row inputs into ONE lane-dense (b_pad, 128) slab
    rows = jnp.zeros((b_pad, ROW_W), jnp.float32)
    rows = rows.at[:B, PC0_OFF:PC0_OFF + 3].set(pcs[:, 0, :].astype(jnp.float32))
    rows = rows.at[:B, CPT_OFF:CPT_OFF + 3].set(contact_point.astype(jnp.float32))
    rows = rows.at[:B, TASK_OFF:TASK_OFF + 1].set(task.reshape(B, 1).astype(jnp.float32))
    rows = rows.at[:B, EPS_OFF:EPS_OFF + z_dim].set(eps.astype(jnp.float32))
    rows = rows.at[:B, traj_off:traj_off + ns6].set(traj.reshape(B, ns6).astype(jnp.float32))

    kernel = functools.partial(
        _fused_forward_kernel, layout=layout,
        feat=dims["feat"], task_feat=dims["task_feat"], cp_feat=dims["cp_feat"],
        traj_z=dims["traj_z"], z_dim=z_dim, ns6=ns6, traj_off=traj_off,
        seg1=dims["seg1"], seg2=dims["seg2"], seg3=dims["seg3"])

    packed = pl.pallas_call(
        kernel,
        out_shape=jax.ShapeDtypeStruct((b_pad, OUT_W), jnp.float32),
        grid=(n_tiles,),
        in_specs=[pl.BlockSpec((tm, ROW_W), lambda i: (i, 0)),      # per-row slab
                  pl.BlockSpec(w_slab.shape, lambda i: (0, 0))],    # weight slab
        out_specs=pl.BlockSpec((tm, OUT_W), lambda i: (i, 0)),
        scratch_shapes=[pltpu.VMEM((tm, ACT_W), jnp.float32)],
        compiler_params=pltpu.CompilerParams(
            dimension_semantics=("parallel",)),
    )(rows, w_slab)

    recon_traj = packed[:B, 0:ns6].reshape(B, num_steps, 6)
    mu = packed[:B, ns6:ns6 + z_dim]
    logvar = packed[:B, ns6 + z_dim:ns6 + 2 * z_dim]
    return recon_traj, mu, logvar


# ----------------------------------------------------------------------------
# main
# ----------------------------------------------------------------------------
if __name__ == "__main__":
    FEAT_DIM = 32
    TRAJ_Z_DIM = 16
    Z_DIM = 16
    CP_FEAT = 32
    TASK_FEAT = 32
    HIDDEN = 64
    HORIZON = 4          # num_steps
    B = 2                # batch
    N_PTS = 16           # points per cloud

    key = jax.random.PRNGKey(0)
    k_par, k_pcs, k_task, k_traj, k_cp, k_eps = jax.random.split(key, 6)

    params = build_params(k_par, FEAT_DIM, TRAJ_Z_DIM, Z_DIM, CP_FEAT,
                          TASK_FEAT, HIDDEN, HORIZON)
    # one-time weight slab packing, cached outside the hot jit call
    w_slab, layout, dims = prepare_params(params, HORIZON)

    pcs = jax.random.normal(k_pcs, (B, N_PTS, 3), jnp.float32)
    task = jax.random.normal(k_task, (B,), jnp.float32)
    traj = jax.random.normal(k_traj, (B, HORIZON, 6), jnp.float32)
    contact_point = jax.random.normal(k_cp, (B, 3), jnp.float32)
    # fixed reparameterization noise (torch.randn equivalent, made deterministic)
    eps = jax.random.normal(k_eps, (B, Z_DIM), jnp.float32)

    fwd = jax.jit(functools.partial(
        traj_proposal_forward, layout=layout, dims=dims,
        num_steps=HORIZON, row_tile=pick_row_tile()))
    recon_traj, mu, logvar = fwd(w_slab, pcs, task, traj, contact_point, eps)
    jax.block_until_ready((recon_traj, mu, logvar))

    assert recon_traj.shape == (B, HORIZON, 6)
    assert mu.shape == (B, Z_DIM) and logvar.shape == (B, Z_DIM)
    assert bool(jnp.all(jnp.isfinite(recon_traj)))
    assert bool(jnp.all(jnp.isfinite(mu))) and bool(jnp.all(jnp.isfinite(logvar)))
    print("KERNEL_OK")
</pallas_src>

<mosaic_0001>
module attributes {stable_mosaic.version = 11 : i64} {
  func.func @_fused_forward_kernel(%arg0: i32, %arg1: memref<8x128xf32, #tpu.memory_space<vmem>>, %arg2: memref<952x128xf32, #tpu.memory_space<vmem>>, %arg3: memref<8x128xf32, #tpu.memory_space<vmem>>, %arg4: memref<8x128xf32, #tpu.memory_space<vmem>>) attributes {dimension_semantics = [#tpu.dimension_semantics<parallel>], iteration_bounds = array<i64: 1>, scalar_prefetch = 0 : i64, scratch_operands = 1 : i64, tpu.core_type = #tpu.core_type<tc>, window_params = [{transform_indices = @transform_0, window_bounds = array<i64: 8, 128>}, {pipeline_mode = #tpu.pipeline_mode<synchronous>, transform_indices = @transform_1, window_bounds = array<i64: 952, 128>}, {transform_indices = @transform_2, window_bounds = array<i64: 8, 128>}]} {
    %c0 = arith.constant 0 : index
    %c0_0 = arith.constant 0 : index
    %0 = vector.load %arg1[%c0, %c0_0] : memref<8x128xf32, #tpu.memory_space<vmem>>, vector<8x128xf32>
    %1 = vector.extract_strided_slice %0 {offsets = [0, 0], sizes = [8, 1], strides = [1, 1]} : vector<8x128xf32> to vector<8x1xf32>
    %2 = vector.extract_strided_slice %0 {offsets = [0, 1], sizes = [8, 1], strides = [1, 1]} : vector<8x128xf32> to vector<8x1xf32>
    %3 = vector.extract_strided_slice %0 {offsets = [0, 2], sizes = [8, 1], strides = [1, 1]} : vector<8x128xf32> to vector<8x1xf32>
    %4 = vector.extract_strided_slice %0 {offsets = [0, 8], sizes = [8, 1], strides = [1, 1]} : vector<8x128xf32> to vector<8x1xf32>
    %5 = vector.extract_strided_slice %0 {offsets = [0, 9], sizes = [8, 1], strides = [1, 1]} : vector<8x128xf32> to vector<8x1xf32>
    %6 = vector.extract_strided_slice %0 {offsets = [0, 10], sizes = [8, 1], strides = [1, 1]} : vector<8x128xf32> to vector<8x1xf32>
    %7 = vector.extract_strided_slice %0 {offsets = [0, 16], sizes = [8, 1], strides = [1, 1]} : vector<8x128xf32> to vector<8x1xf32>
    %8 = vector.extract_strided_slice %0 {offsets = [0, 24], sizes = [8, 16], strides = [1, 1]} : vector<8x128xf32> to vector<8x16xf32>
    %9 = vector.extract_strided_slice %0 {offsets = [0, 40], sizes = [8, 24], strides = [1, 1]} : vector<8x128xf32> to vector<8x24xf32>
    %c0_1 = arith.constant 0 : index
    %c0_2 = arith.constant 0 : index
    %10 = vector.load %arg2[%c0_1, %c0_2] : memref<952x128xf32, #tpu.memory_space<vmem>>, vector<8x32xf32>
    %11 = vector.extract_strided_slice %10 {offsets = [0, 0], sizes = [1, 32], strides = [1, 1]} : vector<8x32xf32> to vector<1x32xf32>
    %12 = vector.broadcast %1 : vector<8x1xf32> to vector<8x32xf32>
    %13 = vector.broadcast %11 : vector<1x32xf32> to vector<8x32xf32>
    %14 = arith.mulf %12, %13 : vector<8x32xf32>
    %15 = vector.extract_strided_slice %10 {offsets = [1, 0], sizes = [1, 32], strides = [1, 1]} : vector<8x32xf32> to vector<1x32xf32>
    %16 = vector.broadcast %2 : vector<8x1xf32> to vector<8x32xf32>
    %17 = vector.broadcast %15 : vector<1x32xf32> to vector<8x32xf32>
    %18 = arith.mulf %16, %17 : vector<8x32xf32>
    %19 = arith.addf %14, %18 : vector<8x32xf32>
    %20 = vector.extract_strided_slice %10 {offsets = [2, 0], sizes = [1, 32], strides = [1, 1]} : vector<8x32xf32> to vector<1x32xf32>
    %21 = vector.broadcast %3 : vector<8x1xf32> to vector<8x32xf32>
    %22 = vector.broadcast %20 : vector<1x32xf32> to vector<8x32xf32>
    %23 = arith.mulf %21, %22 : vector<8x32xf32>
    %24 = arith.addf %19, %23 : vector<8x32xf32>
    %c8 = arith.constant 8 : index
    %c0_3 = arith.constant 0 : index
    %25 = vector.load %arg2[%c8, %c0_3] : memref<952x128xf32, #tpu.memory_space<vmem>>, vector<1x32xf32>
    %26 = vector.broadcast %25 : vector<1x32xf32> to vector<8x32xf32>
    %27 = arith.addf %24, %26 : vector<8x32xf32>
    %cst = arith.constant 0.000000e+00 : f32
    %28 = vector.broadcast %cst : f32 to vector<8x32xf32>
    %29 = arith.maximumf %27, %28 : vector<8x32xf32>
    %c16 = arith.constant 16 : index
    %c0_4 = arith.constant 0 : index
    %30 = vector.load %arg2[%c16, %c0_4] : memref<952x128xf32, #tpu.memory_space<vmem>>, vector<32x32xf32>
    %cst_5 = arith.constant dense<0.000000e+00> : vector<8x32xf32>
    %31 = tpu.matmul %29, %30, %cst_5 {dimension_numbers = #tpu.dot_dimension_numbers<[1], [0], [0], [1], [0, 0, 1, 1], [], []>} : vector<8x32xf32>, vector<32x32xf32>, vector<8x32xf32> -> vector<8x32xf32>
    %c48 = arith.constant 48 : index
    %c0_6 = arith.constant 0 : index
    %32 = vector.load %arg2[%c48, %c0_6] : memref<952x128xf32, #tpu.memory_space<vmem>>, vector<1x32xf32>
    %33 = vector.broadcast %32 : vector<1x32xf32> to vector<8x32xf32>
    %34 = arith.addf %31, %33 : vector<8x32xf32>
    %c56 = arith.constant 56 : index
    %c0_7 = arith.constant 0 : index
    %35 = vector.load %arg2[%c56, %c0_7] : memref<952x128xf32, #tpu.memory_space<vmem>>, vector<8x32xf32>
    %36 = vector.extract_strided_slice %35 {offsets = [0, 0], sizes = [1, 32], strides = [1, 1]} : vector<8x32xf32> to vector<1x32xf32>
    %37 = vector.broadcast %4 : vector<8x1xf32> to vector<8x32xf32>
    %38 = vector.broadcast %36 : vector<1x32xf32> to vector<8x32xf32>
    %39 = arith.mulf %37, %38 : vector<8x32xf32>
    %40 = vector.extract_strided_slice %35 {offsets = [1, 0], sizes = [1, 32], strides = [1, 1]} : vector<8x32xf32> to vector<1x32xf32>
    %41 = vector.broadcast %5 : vector<8x1xf32> to vector<8x32xf32>
    %42 = vector.broadcast %40 : vector<1x32xf32> to vector<8x32xf32>
    %43 = arith.mulf %41, %42 : vector<8x32xf32>
    %44 = arith.addf %39, %43 : vector<8x32xf32>
    %45 = vector.extract_strided_slice %35 {offsets = [2, 0], sizes = [1, 32], strides = [1, 1]} : vector<8x32xf32> to vector<1x32xf32>
    %46 = vector.broadcast %6 : vector<8x1xf32> to vector<8x32xf32>
    %47 = vector.broadcast %45 : vector<1x32xf32> to vector<8x32xf32>
    %48 = arith.mulf %46, %47 : vector<8x32xf32>
    %49 = arith.addf %44, %48 : vector<8x32xf32>
    %c64 = arith.constant 64 : index
    %c0_8 = arith.constant 0 : index
    %50 = vector.load %arg2[%c64, %c0_8] : memref<952x128xf32, #tpu.memory_space<vmem>>, vector<1x32xf32>
    %51 = vector.broadcast %50 : vector<1x32xf32> to vector<8x32xf32>
    %52 = arith.addf %49, %51 : vector<8x32xf32>
    %c72 = arith.constant 72 : index
    %c0_9 = arith.constant 0 : index
    %53 = vector.load %arg2[%c72, %c0_9] : memref<952x128xf32, #tpu.memory_space<vmem>>, vector<8x32xf32>
    %54 = vector.extract_strided_slice %53 {offsets = [0, 0], sizes = [1, 32], strides = [1, 1]} : vector<8x32xf32> to vector<1x32xf32>
    %55 = vector.broadcast %7 : vector<8x1xf32> to vector<8x32xf32>
    %56 = vector.broadcast %54 : vector<1x32xf32> to vector<8x32xf32>
    %57 = arith.mulf %55, %56 : vector<8x32xf32>
    %c80 = arith.constant 80 : index
    %c0_10 = arith.constant 0 : index
    %58 = vector.load %arg2[%c80, %c0_10] : memref<952x128xf32, #tpu.memory_space<vmem>>, vector<1x32xf32>
    %59 = vector.broadcast %58 : vector<1x32xf32> to vector<8x32xf32>
    %60 = arith.addf %57, %59 : vector<8x32xf32>
    %c88 = arith.constant 88 : index
    %c0_11 = arith.constant 0 : index
    %61 = vector.load %arg2[%c88, %c0_11] : memref<952x128xf32, #tpu.memory_space<vmem>>, vector<24x128xf32>
    %cst_12 = arith.constant dense<0.000000e+00> : vector<8x128xf32>
    %62 = tpu.matmul %9, %61, %cst_12 {dimension_numbers = #tpu.dot_dimension_numbers<[1], [0], [0], [1], [0, 0, 1, 1], [], []>} : vector<8x24xf32>, vector<24x128xf32>, vector<8x128xf32> -> vector<8x128xf32>
    %c112 = arith.constant 112 : index
    %c0_13 = arith.constant 0 : index
    %63 = vector.load %arg2[%c112, %c0_13] : memref<952x128xf32, #tpu.memory_space<vmem>>, vector<1x128xf32>
    %64 = vector.broadcast %63 : vector<1x128xf32> to vector<8x128xf32>
    %65 = arith.addf %62, %64 : vector<8x128xf32>
    %cst_14 = arith.constant 0.000000e+00 : f32
    %66 = vector.broadcast %cst_14 : f32 to vector<8x128xf32>
    %67 = arith.maximumf %65, %66 : vector<8x128xf32>
    %c120 = arith.constant 120 : index
    %c0_15 = arith.constant 0 : index
    %68 = vector.load %arg2[%c120, %c0_15] : memref<952x128xf32, #tpu.memory_space<vmem>>, vector<128x128xf32>
    %cst_16 = arith.constant dense<0.000000e+00> : vector<8x128xf32>
    %69 = tpu.matmul %67, %68, %cst_16 {dimension_numbers = #tpu.dot_dimension_numbers<[1], [0], [0], [1], [0, 0, 1, 1], [], []>} : vector<8x128xf32>, vector<128x128xf32>, vector<8x128xf32> -> vector<8x128xf32>
    %c248 = arith.constant 248 : index
    %c0_17 = arith.constant 0 : index
    %70 = vector.load %arg2[%c248, %c0_17] : memref<952x128xf32, #tpu.memory_space<vmem>>, vector<1x128xf32>
    %71 = vector.broadcast %70 : vector<1x128xf32> to vector<8x128xf32>
    %72 = arith.addf %69, %71 : vector<8x128xf32>
    %cst_18 = arith.constant 0.000000e+00 : f32
    %73 = vector.broadcast %cst_18 : f32 to vector<8x128xf32>
    %74 = arith.maximumf %72, %73 : vector<8x128xf32>
    %c256 = arith.constant 256 : index
    %c0_19 = arith.constant 0 : index
    %75 = vector.load %arg2[%c256, %c0_19] : memref<952x128xf32, #tpu.memory_space<vmem>>, vector<128x16xf32>
    %cst_20 = arith.constant dense<0.000000e+00> : vector<8x16xf32>
    %76 = tpu.matmul %74, %75, %cst_20 {dimension_numbers = #tpu.dot_dimension_numbers<[1], [0], [0], [1], [0, 0, 1, 1], [], []>} : vector<8x128xf32>, vector<128x16xf32>, vector<8x16xf32> -> vector<8x16xf32>
    %c384 = arith.constant 384 : index
    %c0_21 = arith.constant 0 : index
    %77 = vector.load %arg2[%c384, %c0_21] : memref<952x128xf32, #tpu.memory_space<vmem>>, vector<1x16xf32>
    %78 = vector.broadcast %77 : vector<1x16xf32> to vector<8x16xf32>
    %79 = arith.addf %76, %78 : vector<8x16xf32>
    %cst_22 = arith.constant 0.000000e+00 : f32
    %80 = vector.broadcast %cst_22 : f32 to vector<8x128xf32>
    %c0_23 = arith.constant 0 : index
    %c0_24 = arith.constant 0 : index
    %81 = vector.load %arg4[%c0_23, %c0_24] : memref<8x128xf32, #tpu.memory_space<vmem>>, vector<8x128xf32>
    tpu.vector_store %arg4[%c0_23, %c0_24], %80 {strides = array<i32>} : memref<8x128xf32, #tpu.memory_space<vmem>>, vector<8x128xf32>,
    %c0_25 = arith.constant 0 : index
    %c16_26 = arith.constant 16 : index
    %82 = vector.load %arg4[%c0_25, %c16_26] : memref<8x128xf32, #tpu.memory_space<vmem>>, vector<8x32xf32>
    tpu.vector_store %arg4[%c0_25, %c16_26], %34 {strides = array<i32>} : memref<8x128xf32, #tpu.memory_space<vmem>>, vector<8x32xf32>,
    %c0_27 = arith.constant 0 : index
    %c48_28 = arith.constant 48 : index
    %83 = vector.load %arg4[%c0_27, %c48_28] : memref<8x128xf32, #tpu.memory_space<vmem>>, vector<8x32xf32>
    tpu.vector_store %arg4[%c0_27, %c48_28], %60 {strides = array<i32>} : memref<8x128xf32, #tpu.memory_space<vmem>>, vector<8x32xf32>,
    %c0_29 = arith.constant 0 : index
    %c80_30 = arith.constant 80 : index
    %84 = vector.load %arg4[%c0_29, %c80_30] : memref<8x128xf32, #tpu.memory_space<vmem>>, vector<8x32xf32>
    tpu.vector_store %arg4[%c0_29, %c80_30], %52 {strides = array<i32>} : memref<8x128xf32, #tpu.memory_space<vmem>>, vector<8x32xf32>,
    %c0_31 = arith.constant 0 : index
    %c0_32 = arith.constant 0 : index
    %85 = vector.load %arg4[%c0_31, %c0_32] : memref<8x128xf32, #tpu.memory_space<vmem>>, vector<8x16xf32>
    tpu.vector_store %arg4[%c0_31, %c0_32], %79 {strides = array<i32>} : memref<8x128xf32, #tpu.memory_space<vmem>>, vector<8x16xf32>,
    %c0_33 = arith.constant 0 : index
    %c0_34 = arith.constant 0 : index
    %86 = vector.load %arg4[%c0_33, %c0_34] : memref<8x128xf32, #tpu.memory_space<vmem>>, vector<8x128xf32>
    %c392 = arith.constant 392 : index
    %c0_35 = arith.constant 0 : index
    %87 = vector.load %arg2[%c392, %c0_35] : memref<952x128xf32, #tpu.memory_space<vmem>>, vector<128x64xf32>
    %cst_36 = arith.constant dense<0.000000e+00> : vector<8x64xf32>
    %88 = tpu.matmul %86, %87, %cst_36 {dimension_numbers = #tpu.dot_dimension_numbers<[1], [0], [0], [1], [0, 0, 1, 1], [], []>} : vector<8x128xf32>, vector<128x64xf32>, vector<8x64xf32> -> vector<8x64xf32>
    %c520 = arith.constant 520 : index
    %c0_37 = arith.constant 0 : index
    %89 = vector.load %arg2[%c520, %c0_37] : memref<952x128xf32, #tpu.memory_space<vmem>>, vector<1x64xf32>
    %90 = vector.broadcast %89 : vector<1x64xf32> to vector<8x64xf32>
    %91 = arith.addf %88, %90 : vector<8x64xf32>
    %cst_38 = arith.constant 0.000000e+00 : f32
    %92 = vector.broadcast %cst_38 : f32 to vector<8x64xf32>
    %93 = arith.maximumf %91, %92 : vector<8x64xf32>
    %c528 = arith.constant 528 : index
    %c0_39 = arith.constant 0 : index
    %94 = vector.load %arg2[%c528, %c0_39] : memref<952x128xf32, #tpu.memory_space<vmem>>, vector<64x64xf32>
    %cst_40 = arith.constant dense<0.000000e+00> : vector<8x64xf32>
    %95 = tpu.matmul %93, %94, %cst_40 {dimension_numbers = #tpu.dot_dimension_numbers<[1], [0], [0], [1], [0, 0, 1, 1], [], []>} : vector<8x64xf32>, vector<64x64xf32>, vector<8x64xf32> -> vector<8x64xf32>
    %c592 = arith.constant 592 : index
    %c0_41 = arith.constant 0 : index
    %96 = vector.load %arg2[%c592, %c0_41] : memref<952x128xf32, #tpu.memory_space<vmem>>, vector<1x64xf32>
    %97 = vector.broadcast %96 : vector<1x64xf32> to vector<8x64xf32>
    %98 = arith.addf %95, %97 : vector<8x64xf32>
    %cst_42 = arith.constant 0.000000e+00 : f32
    %99 = vector.broadcast %cst_42 : f32 to vector<8x64xf32>
    %100 = arith.maximumf %98, %99 : vector<8x64xf32>
    %c600 = arith.constant 600 : index
    %c0_43 = arith.constant 0 : index
    %101 = vector.load %arg2[%c600, %c0_43] : memref<952x128xf32, #tpu.memory_space<vmem>>, vector<64x128xf32>
    %cst_44 = arith.constant dense<0.000000e+00> : vector<8x128xf32>
    %102 = tpu.matmul %100, %101, %cst_44 {dimension_numbers = #tpu.dot_dimension_numbers<[1], [0], [0], [1], [0, 0, 1, 1], [], []>} : vector<8x64xf32>, vector<64x128xf32>, vector<8x128xf32> -> vector<8x128xf32>
    %c664 = arith.constant 664 : index
    %c0_45 = arith.constant 0 : index
    %103 = vector.load %arg2[%c664, %c0_45] : memref<952x128xf32, #tpu.memory_space<vmem>>, vector<1x128xf32>
    %104 = vector.broadcast %103 : vector<1x128xf32> to vector<8x128xf32>
    %105 = arith.addf %102, %104 : vector<8x128xf32>
    %106 = vector.extract_strided_slice %105 {offsets = [0, 24], sizes = [8, 16], strides = [1, 1]} : vector<8x128xf32> to vector<8x16xf32>
    %107 = vector.extract_strided_slice %105 {offsets = [0, 40], sizes = [8, 16], strides = [1, 1]} : vector<8x128xf32> to vector<8x16xf32>
    %cst_46 = arith.constant 5.000000e-01 : f32
    %108 = vector.broadcast %cst_46 : f32 to vector<8x16xf32>
    %109 = arith.mulf %108, %107 : vector<8x16xf32>
    %110 = math.exp %109 : vector<8x16xf32>
    %111 = arith.mulf %8, %110 : vector<8x16xf32>
    %112 = arith.addf %106, %111 : vector<8x16xf32>
    %c0_47 = arith.constant 0 : index
    %c0_48 = arith.constant 0 : index
    %113 = vector.load %arg4[%c0_47, %c0_48] : memref<8x128xf32, #tpu.memory_space<vmem>>, vector<8x16xf32>
    tpu.vector_store %arg4[%c0_47, %c0_48], %112 {strides = array<i32>} : memref<8x128xf32, #tpu.memory_space<vmem>>, vector<8x16xf32>,
    %c0_49 = arith.constant 0 : index
    %c0_50 = arith.constant 0 : index
    %114 = vector.load %arg4[%c0_49, %c0_50] : memref<8x128xf32, #tpu.memory_space<vmem>>, vector<8x128xf32>
    %c672 = arith.constant 672 : index
    %c0_51 = arith.constant 0 : index
    %115 = vector.load %arg2[%c672, %c0_51] : memref<952x128xf32, #tpu.memory_space<vmem>>, vector<128x64xf32>
    %cst_52 = arith.constant dense<0.000000e+00> : vector<8x64xf32>
    %116 = tpu.matmul %114, %115, %cst_52 {dimension_numbers = #tpu.dot_dimension_numbers<[1], [0], [0], [1], [0, 0, 1, 1], [], []>} : vector<8x128xf32>, vector<128x64xf32>, vector<8x64xf32> -> vector<8x64xf32>
    %c800 = arith.constant 800 : index
    %c0_53 = arith.constant 0 : index
    %117 = vector.load %arg2[%c800, %c0_53] : memref<952x128xf32, #tpu.memory_space<vmem>>, vector<1x64xf32>
    %118 = vector.broadcast %117 : vector<1x64xf32> to vector<8x64xf32>
    %119 = arith.addf %116, %118 : vector<8x64xf32>
    %cst_54 = arith.constant 0.000000e+00 : f32
    %120 = vector.broadcast %cst_54 : f32 to vector<8x64xf32>
    %121 = arith.maximumf %119, %120 : vector<8x64xf32>
    %c808 = arith.constant 808 : index
    %c0_55 = arith.constant 0 : index
    %122 = vector.load %arg2[%c808, %c0_55] : memref<952x128xf32, #tpu.memory_space<vmem>>, vector<64x64xf32>
    %cst_56 = arith.constant dense<0.000000e+00> : vector<8x64xf32>
    %123 = tpu.matmul %121, %122, %cst_56 {dimension_numbers = #tpu.dot_dimension_numbers<[1], [0], [0], [1], [0, 0, 1, 1], [], []>} : vector<8x64xf32>, vector<64x64xf32>, vector<8x64xf32> -> vector<8x64xf32>
    %c872 = arith.constant 872 : index
    %c0_57 = arith.constant 0 : index
    %124 = vector.load %arg2[%c872, %c0_57] : memref<952x128xf32, #tpu.memory_space<vmem>>, vector<1x64xf32>
    %125 = vector.broadcast %124 : vector<1x64xf32> to vector<8x64xf32>
    %126 = arith.addf %123, %125 : vector<8x64xf32>
    %cst_58 = arith.constant 0.000000e+00 : f32
    %127 = vector.broadcast %cst_58 : f32 to vector<8x64xf32>
    %128 = arith.maximumf %126, %127 : vector<8x64xf32>
    %c880 = arith.constant 880 : index
    %c0_59 = arith.constant 0 : index
    %129 = vector.load %arg2[%c880, %c0_59] : memref<952x128xf32, #tpu.memory_space<vmem>>, vector<64x128xf32>
    %cst_60 = arith.constant dense<0.000000e+00> : vector<8x128xf32>
    %130 = tpu.matmul %128, %129, %cst_60 {dimension_numbers = #tpu.dot_dimension_numbers<[1], [0], [0], [1], [0, 0, 1, 1], [], []>} : vector<8x64xf32>, vector<64x128xf32>, vector<8x128xf32> -> vector<8x128xf32>
    %c944 = arith.constant 944 : index
    %c0_61 = arith.constant 0 : index
    %131 = vector.load %arg2[%c944, %c0_61] : memref<952x128xf32, #tpu.memory_space<vmem>>, vector<1x128xf32>
    %132 = vector.broadcast %131 : vector<1x128xf32> to vector<8x128xf32>
    %133 = arith.addf %130, %132 : vector<8x128xf32>
    %134 = arith.addf %133, %105 : vector<8x128xf32>
    %c0_62 = arith.constant 0 : index
    %c0_63 = arith.constant 0 : index
    %135 = vector.load %arg3[%c0_62, %c0_63] : memref<8x128xf32, #tpu.memory_space<vmem>>, vector<8x128xf32>
    tpu.vector_store %arg3[%c0_62, %c0_63], %134 {strides = array<i32>} : memref<8x128xf32, #tpu.memory_space<vmem>>, vector<8x128xf32>,
    return
  }
  func.func @transform_0(%arg0: i32) -> (i32, i32) {
    %c0_i32 = arith.constant 0 : i32
    %c0_i32_0 = arith.constant 0 : i32
    return %arg0, %c0_i32 : i32, i32
  }
  func.func @transform_1(%arg0: i32) -> (i32, i32) {
    %c0_i32 = arith.constant 0 : i32
    %c0_i32_0 = arith.constant 0 : i32
    %c0_i32_1 = arith.constant 0 : i32
    return %c0_i32, %c0_i32_0 : i32, i32
  }
  func.func @transform_2(%arg0: i32) -> (i32, i32) {
    %c0_i32 = arith.constant 0 : i32
    %c0_i32_0 = arith.constant 0 : i32
    return %arg0, %c0_i32 : i32, i32
  }
}

</mosaic_0001>

<llo_original>
// kernel: traj_proposal_forward.1
$region0: #{traj_proposal_forward.1}
  #allocation0 [shape = 'u32[]', space=smem, size = 0x4, offset = 0x4, fixed_abs, tag = 'smem constant byte address 0x4 - core index']
  #allocation1 [shape = 'u32[144,128]{1,0:T(1,128)}', space=vmem, size = 0x12000, scoped, tag = 'internal scratch']
  #allocation2 [shape = 'f32[8,128]{1,0:T(8,128)}', space=vmem, size = 0x1000, scoped, tag = 'scratch operand']
  %s0 = inlined_call_operand.vmem [shape: f32[8,128], index: 0, kind: input, shape index: {}]
  %s1 = inlined_call_operand.hbm [shape: f32[952,128], index: 1, kind: input, shape index: {}]
  %s2 = inlined_call_operand.vmem [shape: f32[8,128], index: 2, kind: output, shape index: {}]
  %s3 = sld [smem:[#allocation0]]
  $region22: #{traj_proposal_forward.1} parent=0
    _
  %s5 = ssub.s32 1, %s3
  %s6 = scalar_select 0, %s5, %s3
  $region1: #{traj_proposal_forward.1} parent=0
    #allocation3 [shape = 'u8[487424]{0}', space=vmem, size = 0x77000, scoped, tag = 'input window, operand 1, single buffered']
    #allocation4 [shape = 's32[1]{0}', space=sflag, size = 0x4, scoped, tag = 'scoped memory for traj_proposal_forward.1']
    %7 = vsyncpa [#allocation4], 0
    // Predicated region
    $region2: #{traj_proposal_forward.1} parent=1 // pred_check
      _
    $region3: #{traj_proposal_forward.1} parent=1 // pred_check_branch
      %9 = sbr.rel (0) target = $region5
    $region4: #{traj_proposal_forward.1} parent=1 // pred_region
      _
    $region5: #{traj_proposal_forward.1} parent=1 // pred_fallthru
      _
    // Predicated region
    $region6: #{traj_proposal_forward.1} parent=1 // pred_check
      _
    $region7: #{traj_proposal_forward.1} parent=1 // pred_check_branch
      %11 = sbr.rel (0) target = $region9
    $region8: #{traj_proposal_forward.1} parent=1 // pred_region
      %s13 = ssub.s32 15232, 15232
      %14 = vsyncadd [#allocation4], %s13
      %s15 = sshll.u32 [#allocation3], 4
      %s16 = int_to_ptr.vmem [resolvable:$true] %s15
      %21 = dma.hbm_to_vmem [thread:$0]  %s1, 15232, %s16, [#allocation4], 128, 128, 8
    $region9: #{traj_proposal_forward.1} parent=1 // pred_fallthru
      _
    // Predicated region
    $region10: #{traj_proposal_forward.1} parent=1 // pred_check
      _
    $region11: #{traj_proposal_forward.1} parent=1 // pred_check_branch
      %23 = sbr.rel (0) target = $region13
    $region12: #{traj_proposal_forward.1} parent=1 // pred_region
      %24 = dma.done [#allocation4], 15232
    $region13: #{traj_proposal_forward.1} parent=1 // pred_fallthru
      _
    %v25 = vld [vmem:[%s0] sm:$0xff]
    %v26 = vld [vmem:[#allocation3] sm:$0xff]
    %28 = vset.pattern.permute.xlu0 0
    %29 = vperm.xlu0 %28, %v25
    %v30 = vpop.permute.xlu0 %29
    %v32 = vlaneseq
    %v33 = vshrl.u32 %v32, 7
    %v34 = vsub.s32 0, %v33
    %v35 = vrot.slane %v26, %v34
    %v36 = vmul.f32 %v30, %v35
    %37 = vset.pattern.permute.xlu0 1
    %38 = vperm.xlu0 %37, %v25
    %v39 = vpop.permute.xlu0 %38
    %v41 = vlaneseq
    %v42 = vshrl.u32 %v41, 7
    %v43 = vsub.s32 1, %v42
    %v44 = vrot.slane %v26, %v43
    %v45 = vmul.f32 %v39, %v44
    %v46 = vadd.f32 %v36, %v45
    %47 = vset.pattern.permute.xlu0 2
    %48 = vperm.xlu0 %47, %v25
    %v49 = vpop.permute.xlu0 %48
    %v51 = vlaneseq
    %v52 = vshrl.u32 %v51, 7
    %v53 = vsub.s32 2, %v52
    %v54 = vrot.slane %v26, %v53
    %v55 = vmul.f32 %v49, %v54
    %v56 = vadd.f32 %v46, %v55
    %v57 = vld [vmem:[#allocation3 + $0x8] sm:$0x1]
    %v58 = vlaneseq
    %v59 = vshrl.u32 %v58, 7
    %v60 = vsub.s32 0, %v59
    %v61 = vrot.slane %v57, %v60
    %v62 = vadd.f32 %v56, %v61
    %v63 = vmax.f32 %v62, 0.0
    %v64 = vld [vmem:[#allocation3 + $0x10] sm:$0xff]
    %v65 = vld [vmem:[#allocation3 + $0x18] sm:$0xff]
    %v66 = vld [vmem:[#allocation3 + $0x20] sm:$0xff]
    %v67 = vld [vmem:[#allocation3 + $0x28] sm:$0xff]
    %v68 = vld [vmem:[#allocation3 + $0x30] sm:$0x1]
    %v69 = vlaneseq
    %v70 = vshrl.u32 %v69, 7
    %v71 = vsub.s32 0, %v70
    %v72 = vrot.slane %v68, %v71
    %vm73 = vcmask 261120
    %v75 = vsel %vm73, %v63, 0
    %77 = vmatprep.subr.mxu0 0.0
    %78 = vmatpush1.msra.mxu0 %v64
    %79 = vmatprep.subr.mxu0 0.0
    %80 = vmatpush1.msra.mxu0 %v65
    %81 = vmatprep.subr.mxu0 0.0
    %82 = vmatpush1.msra.mxu0 %v66
    %83 = vmatprep.subr.mxu0 0.0
    %84 = vmatpush1.msra.mxu0 %v67
    %85 = vmatprep.subr.mxu0 0.0
    %86 = vmatpush1.msra.mxu0 0.0
    %87 = vmatprep.subr.mxu0 0.0
    %88 = vmatpush1.msra.mxu0 0.0
    %89 = vmatprep.subr.mxu0 0.0
    %90 = vmatpush1.msra.mxu0 0.0
    %91 = vmatprep.subr.mxu0 0.0
    %92 = vmatpush1.msra.mxu0 0.0
    %93 = vmatprep.subr.mxu0 0.0
    %94 = vmatpush1.msra.mxu0 0.0
    %95 = vmatprep.subr.mxu0 0.0
    %96 = vmatpush1.msra.mxu0 0.0
    %97 = vmatprep.subr.mxu0 0.0
    %98 = vmatpush1.msra.mxu0 0.0
    %99 = vmatprep.subr.mxu0 0.0
    %100 = vmatpush1.msra.mxu0 0.0
    %101 = vmatprep.subr.mxu0 0.0
    %102 = vmatpush1.msra.mxu0 0.0
    %103 = vmatprep.subr.mxu0 0.0
    %104 = vmatpush1.msra.mxu0 0.0
    %105 = vmatprep.subr.mxu0 0.0
    %106 = vmatpush1.msra.mxu0 0.0
    %107 = vmatprep.subr.mxu0 0.0
    %108 = vmatpush1.msra.mxu0 0.0
    %109 = vmatprep.subr.mxu0 0.0
    %110 = vmatpush1.msra.mxu0 0.0
    %111 = vmatprep.subr.mxu0 0.0
    %112 = vmatpush1.msra.mxu0 0.0
    %113 = vmatprep.subr.mxu0 0.0
    %114 = vmatpush1.msra.mxu0 0.0
    %115 = vmatprep.subr.mxu0 0.0
    %116 = vmatpush1.msra.mxu0 0.0
    %117 = vmatprep.subr.mxu0 0.0
    %118 = vmatpush1.msra.mxu0 0.0
    %119 = vmatprep.subr.mxu0 0.0
    %120 = vmatpush1.msra.mxu0 0.0
    %121 = vmatprep.subr.mxu0 0.0
    %122 = vmatpush1.msra.mxu0 0.0
    %123 = vmatprep.subr.mxu0 0.0
    %124 = vmatpush1.msra.mxu0 0.0
    %125 = vmatprep.subr.mxu0 0.0
    %126 = vmatpush1.msra.mxu0 0.0
    %127 = vmatprep.subr.mxu0 0.0
    %128 = vmatpush1.msra.mxu0 0.0
    %129 = vmatprep.subr.mxu0 0.0
    %130 = vmatpush1.msra.mxu0 0.0
    %131 = vmatprep.subr.mxu0 0.0
    %132 = vmatpush1.msra.mxu0 0.0
    %133 = vmatprep.subr.mxu0 0.0
    %134 = vmatpush1.msra.mxu0 0.0
    %135 = vmatprep.subr.mxu0 0.0
    %136 = vmatpush1.msra.mxu0 0.0
    %137 = vmatprep.subr.mxu0 0.0
    %138 = vmatpush1.msra.mxu0 0.0
    %139 = vmatprep.subr.mxu0 0.0
    %140 = vmatpush1.msra.mxu0 0.0
    %141 = vmatprep.mubr.f32.mxu0 0.0
    %142 = vmatmul.mubr.f32.gmra.mrb[0].mxu0 %v75
    %v143 = vpop.f32.mrb[0].mxu0
    %v144 = vadd.f32 %v72, %v143
    %v145 = vpop.f32.mrb[0].mxu0
    %146 = vdwg.mxu0
    %v147 = vld [vmem:[#allocation3 + $0x38] sm:$0xff]
    %148 = vset.pattern.permute.xlu0 8
    %149 = vperm.xlu0 %148, %v25
    %v150 = vpop.permute.xlu0 %149
    %v152 = vlaneseq
    %v153 = vshrl.u32 %v152, 7
    %v154 = vsub.s32 0, %v153
    %v155 = vrot.slane %v147, %v154
    %v156 = vmul.f32 %v150, %v155
    %157 = vset.pattern.permute.xlu0 9
    %158 = vperm.xlu0 %157, %v25
    %v159 = vpop.permute.xlu0 %158
    %v161 = vlaneseq
    %v162 = vshrl.u32 %v161, 7
    %v163 = vsub.s32 1, %v162
    %v164 = vrot.slane %v147, %v163
    %v165 = vmul.f32 %v159, %v164
    %v166 = vadd.f32 %v156, %v165
    %167 = vset.pattern.permute.xlu0 10
    %168 = vperm.xlu0 %167, %v25
    %v169 = vpop.permute.xlu0 %168
    %v171 = vlaneseq
    %v172 = vshrl.u32 %v171, 7
    %v173 = vsub.s32 2, %v172
    %v174 = vrot.slane %v147, %v173
    %v175 = vmul.f32 %v169, %v174
    %v176 = vadd.f32 %v166, %v175
    %v177 = vld [vmem:[#allocation3 + $0x40] sm:$0x1]
    %v178 = vlaneseq
    %v179 = vshrl.u32 %v178, 7
    %v180 = vsub.s32 0, %v179
    %v181 = vrot.slane %v177, %v180
    %v182 = vadd.f32 %v176, %v181
    %v183 = vld [vmem:[#allocation3 + $0x48] sm:$0xff]
    %184 = vset.pattern.permute.xlu0 16
    %185 = vperm.xlu0 %184, %v25
    %v186 = vpop.permute.xlu0 %185
    %v188 = vlaneseq
    %v189 = vshrl.u32 %v188, 7
    %v190 = vsub.s32 0, %v189
    %v191 = vrot.slane %v183, %v190
    %v192 = vmul.f32 %v186, %v191
    %v193 = vld [vmem:[#allocation3 + $0x50] sm:$0x1]
    %v194 = vlaneseq
    %v195 = vshrl.u32 %v194, 7
    %v196 = vsub.s32 0, %v195
    %v197 = vrot.slane %v193, %v196
    %v198 = vadd.f32 %v192, %v197
    %v199 = vld [vmem:[#allocation3 + $0x58] sm:$0xff]
    %v200 = vld [vmem:[#allocation3 + $0x60] sm:$0xff]
    %v201 = vld [vmem:[#allocation3 + $0x68] sm:$0xff]
    %v202 = vld [vmem:[#allocation3 + $0x70] sm:$0x1]
    %v203 = vlaneseq
    %v204 = vshrl.u32 %v203, 7
    %v205 = vsub.s32 0, %v204
    %v206 = vrot.slane %v202, %v205
    %207 = vrot.lane.b32.xlu0 %v25, 88
    %v208 = vpop.permute.xlu0 %207
    %vm209 = vcmask 195584
    %v210 = vsel %vm209, %v208, 0
    %212 = vmatprep.subr.mxu0 0.0
    %213 = vmatpush1.msra.mxu0 %v199
    %214 = vmatprep.subr.mxu0 0.0
    %215 = vmatpush1.msra.mxu0 %v200
    %216 = vmatprep.subr.mxu0 0.0
    %217 = vmatpush1.msra.mxu0 %v201
    %218 = vmatprep.subr.mxu0 0.0
    %219 = vmatpush1.msra.mxu0 0.0
    %220 = vmatprep.subr.mxu0 0.0
    %221 = vmatpush1.msra.mxu0 0.0
    %222 = vmatprep.subr.mxu0 0.0
    %223 = vmatpush1.msra.mxu0 0.0
    %224 = vmatprep.subr.mxu0 0.0
    %225 = vmatpush1.msra.mxu0 0.0
    %226 = vmatprep.subr.mxu0 0.0
    %227 = vmatpush1.msra.mxu0 0.0
    %228 = vmatprep.subr.mxu0 0.0
    %229 = vmatpush1.msra.mxu0 0.0
    %230 = vmatprep.subr.mxu0 0.0
    %231 = vmatpush1.msra.mxu0 0.0
    %232 = vmatprep.subr.mxu0 0.0
    %233 = vmatpush1.msra.mxu0 0.0
    %234 = vmatprep.subr.mxu0 0.0
    %235 = vmatpush1.msra.mxu0 0.0
    %236 = vmatprep.subr.mxu0 0.0
    %237 = vmatpush1.msra.mxu0 0.0
    %238 = vmatprep.subr.mxu0 0.0
    %239 = vmatpush1.msra.mxu0 0.0
    %240 = vmatprep.subr.mxu0 0.0
    %241 = vmatpush1.msra.mxu0 0.0
    %242 = vmatprep.subr.mxu0 0.0
    %243 = vmatpush1.msra.mxu0 0.0
    %244 = vmatprep.subr.mxu0 0.0
    %245 = vmatpush1.msra.mxu0 0.0
    %246 = vmatprep.subr.mxu0 0.0
    %247 = vmatpush1.msra.mxu0 0.0
    %248 = vmatprep.subr.mxu0 0.0
    %249 = vmatpush1.msra.mxu0 0.0
    %250 = vmatprep.subr.mxu0 0.0
    %251 = vmatpush1.msra.mxu0 0.0
    %252 = vmatprep.subr.mxu0 0.0
    %253 = vmatpush1.msra.mxu0 0.0
    %254 = vmatprep.subr.mxu0 0.0
    %255 = vmatpush1.msra.mxu0 0.0
    %256 = vmatprep.subr.mxu0 0.0
    %257 = vmatpush1.msra.mxu0 0.0
    %258 = vmatprep.subr.mxu0 0.0
    %259 = vmatpush1.msra.mxu0 0.0
    %260 = vmatprep.subr.mxu0 0.0
    %261 = vmatpush1.msra.mxu0 0.0
    %262 = vmatprep.subr.mxu0 0.0
    %263 = vmatpush1.msra.mxu0 0.0
    %264 = vmatprep.subr.mxu0 0.0
    %265 = vmatpush1.msra.mxu0 0.0
    %266 = vmatprep.subr.mxu0 0.0
    %267 = vmatpush1.msra.mxu0 0.0
    %268 = vmatprep.subr.mxu0 0.0
    %269 = vmatpush1.msra.mxu0 0.0
    %270 = vmatprep.subr.mxu0 0.0
    %271 = vmatpush1.msra.mxu0 0.0
    %272 = vmatprep.subr.mxu0 0.0
    %273 = vmatpush1.msra.mxu0 0.0
    %274 = vmatprep.subr.mxu0 0.0
    %275 = vmatpush1.msra.mxu0 0.0
    %276 = vmatprep.mubr.f32.mxu0 0.0
    %277 = vmatmul.mubr.f32.gmra.mrb[0].mxu0 %v210
    %v278 = vpop.f32.mrb[0].mxu0
    %v279 = vadd.f32 %v206, %v278
    %v280 = vpop.f32.mrb[0].mxu0
    %281 = vdwg.mxu0
    %v282 = vmax.f32 %v279, 0.0
    %v283 = vld [vmem:[#allocation3 + $0x78] sm:$0xff]
    %v284 = vld [vmem:[#allocation3 + $0x80] sm:$0xff]
    %v285 = vld [vmem:[#allocation3 + $0x88] sm:$0xff]
    %v286 = vld [vmem:[#allocation3 + $0x90] sm:$0xff]
    %v287 = vld [vmem:[#allocation3 + $0x98] sm:$0xff]
    %v288 = vld [vmem:[#allocation3 + $0xa0] sm:$0xff]
    %v289 = vld [vmem:[#allocation3 + $0xa8] sm:$0xff]
    %v290 = vld [vmem:[#allocation3 + $0xb0] sm:$0xff]
    %v291 = vld [vmem:[#allocation3 + $0xb8] sm:$0xff]
    %v292 = vld [vmem:[#allocation3 + $0xc0] sm:$0xff]
    %v293 = vld [vmem:[#allocation3 + $0xc8] sm:$0xff]
    %v294 = vld [vmem:[#allocation3 + $0xd0] sm:$0xff]
    %v295 = vld [vmem:[#allocation3 + $0xd8] sm:$0xff]
    %v296 = vld [vmem:[#allocation3 + $0xe0] sm:$0xff]
    %v297 = vld [vmem:[#allocation3 + $0xe8] sm:$0xff]
    %v298 = vld [vmem:[#allocation3 + $0xf0] sm:$0xff]
    %v299 = vld [vmem:[#allocation3 + $0xf8] sm:$0x1]
    %v300 = vlaneseq
    %v301 = vshrl.u32 %v300, 7
    %v302 = vsub.s32 0, %v301
    %v303 = vrot.slane %v299, %v302
    %304 = vmatprep.subr.mxu0 0.0
    %305 = vmatpush1.msra.mxu0 %v283
    %306 = vmatprep.subr.mxu0 0.0
    %307 = vmatpush1.msra.mxu0 %v284
    %308 = vmatprep.subr.mxu0 0.0
    %309 = vmatpush1.msra.mxu0 %v285
    %310 = vmatprep.subr.mxu0 0.0
    %311 = vmatpush1.msra.mxu0 %v286
    %312 = vmatprep.subr.mxu0 0.0
    %313 = vmatpush1.msra.mxu0 %v287
    %314 = vmatprep.subr.mxu0 0.0
    %315 = vmatpush1.msra.mxu0 %v288
    %316 = vmatprep.subr.mxu0 0.0
    %317 = vmatpush1.msra.mxu0 %v289
    %318 = vmatprep.subr.mxu0 0.0
    %319 = vmatpush1.msra.mxu0 %v290
    %320 = vmatprep.subr.mxu0 0.0
    %321 = vmatpush1.msra.mxu0 %v291
    %322 = vmatprep.subr.mxu0 0.0
    %323 = vmatpush1.msra.mxu0 %v292
    %324 = vmatprep.subr.mxu0 0.0
    %325 = vmatpush1.msra.mxu0 %v293
    %326 = vmatprep.subr.mxu0 0.0
    %327 = vmatpush1.msra.mxu0 %v294
    %328 = vmatprep.subr.mxu0 0.0
    %329 = vmatpush1.msra.mxu0 %v295
    %330 = vmatprep.subr.mxu0 0.0
    %331 = vmatpush1.msra.mxu0 %v296
    %332 = vmatprep.subr.mxu0 0.0
    %333 = vmatpush1.msra.mxu0 %v297
    %334 = vmatprep.subr.mxu0 0.0
    %335 = vmatpush1.msra.mxu0 %v298
    %336 = vmatprep.subr.mxu0 0.0
    %337 = vmatpush1.msra.mxu0 0.0
    %338 = vmatprep.subr.mxu0 0.0
    %339 = vmatpush1.msra.mxu0 0.0
    %340 = vmatprep.subr.mxu0 0.0
    %341 = vmatpush1.msra.mxu0 0.0
    %342 = vmatprep.subr.mxu0 0.0
    %343 = vmatpush1.msra.mxu0 0.0
    %344 = vmatprep.subr.mxu0 0.0
    %345 = vmatpush1.msra.mxu0 0.0
    %346 = vmatprep.subr.mxu0 0.0
    %347 = vmatpush1.msra.mxu0 0.0
    %348 = vmatprep.subr.mxu0 0.0
    %349 = vmatpush1.msra.mxu0 0.0
    %350 = vmatprep.subr.mxu0 0.0
    %351 = vmatpush1.msra.mxu0 0.0
    %352 = vmatprep.subr.mxu0 0.0
    %353 = vmatpush1.msra.mxu0 0.0
    %354 = vmatprep.subr.mxu0 0.0
    %355 = vmatpush1.msra.mxu0 0.0
    %356 = vmatprep.subr.mxu0 0.0
    %357 = vmatpush1.msra.mxu0 0.0
    %358 = vmatprep.subr.mxu0 0.0
    %359 = vmatpush1.msra.mxu0 0.0
    %360 = vmatprep.subr.mxu0 0.0
    %361 = vmatpush1.msra.mxu0 0.0
    %362 = vmatprep.subr.mxu0 0.0
    %363 = vmatpush1.msra.mxu0 0.0
    %364 = vmatprep.subr.mxu0 0.0
    %365 = vmatpush1.msra.mxu0 0.0
    %366 = vmatprep.subr.mxu0 0.0
    %367 = vmatpush1.msra.mxu0 0.0
    %368 = vmatprep.mubr.f32.mxu0 0.0
    %369 = vmatmul.mubr.f32.gmra.mrb[0].mxu0 %v282
    %v370 = vpop.f32.mrb[0].mxu0
    %v371 = vadd.f32 %v303, %v370
    %v372 = vpop.f32.mrb[0].mxu0
    %373 = vdwg.mxu0
    %v374 = vmax.f32 %v371, 0.0
    %v375 = vld [vmem:[#allocation3 + $0x100] sm:$0xff]
    %v376 = vld [vmem:[#allocation3 + $0x108] sm:$0xff]
    %v377 = vld [vmem:[#allocation3 + $0x110] sm:$0xff]
    %v378 = vld [vmem:[#allocation3 + $0x118] sm:$0xff]
    %v379 = vld [vmem:[#allocation3 + $0x120] sm:$0xff]
    %v380 = vld [vmem:[#allocation3 + $0x128] sm:$0xff]
    %v381 = vld [vmem:[#allocation3 + $0x130] sm:$0xff]
    %v382 = vld [vmem:[#allocation3 + $0x138] sm:$0xff]
    %v383 = vld [vmem:[#allocation3 + $0x140] sm:$0xff]
    %v384 = vld [vmem:[#allocation3 + $0x148] sm:$0xff]
    %v385 = vld [vmem:[#allocation3 + $0x150] sm:$0xff]
    %v386 = vld [vmem:[#allocation3 + $0x158] sm:$0xff]
    %v387 = vld [vmem:[#allocation3 + $0x160] sm:$0xff]
    %v388 = vld [vmem:[#allocation3 + $0x168] sm:$0xff]
    %v389 = vld [vmem:[#allocation3 + $0x170] sm:$0xff]
    %v390 = vld [vmem:[#allocation3 + $0x178] sm:$0xff]
    %v391 = vld [vmem:[#allocation3 + $0x180] sm:$0x1]
    %v392 = vlaneseq
    %v393 = vshrl.u32 %v392, 7
    %v394 = vsub.s32 0, %v393
    %v395 = vrot.slane %v391, %v394
    %396 = vmatprep.subr.mxu0 0.0
    %397 = vmatpush1.msra.mxu0 %v375
    %398 = vmatprep.subr.mxu0 0.0
    %399 = vmatpush1.msra.mxu0 %v376
    %400 = vmatprep.subr.mxu0 0.0
    %401 = vmatpush1.msra.mxu0 %v377
    %402 = vmatprep.subr.mxu0 0.0
    %403 = vmatpush1.msra.mxu0 %v378
    %404 = vmatprep.subr.mxu0 0.0
    %405 = vmatpush1.msra.mxu0 %v379
    %406 = vmatprep.subr.mxu0 0.0
    %407 = vmatpush1.msra.mxu0 %v380
    %408 = vmatprep.subr.mxu0 0.0
    %409 = vmatpush1.msra.mxu0 %v381
    %410 = vmatprep.subr.mxu0 0.0
    %411 = vmatpush1.msra.mxu0 %v382
    %412 = vmatprep.subr.mxu0 0.0
    %413 = vmatpush1.msra.mxu0 %v383
    %414 = vmatprep.subr.mxu0 0.0
    %415 = vmatpush1.msra.mxu0 %v384
    %416 = vmatprep.subr.mxu0 0.0
    %417 = vmatpush1.msra.mxu0 %v385
    %418 = vmatprep.subr.mxu0 0.0
    %419 = vmatpush1.msra.mxu0 %v386
    %420 = vmatprep.subr.mxu0 0.0
    %421 = vmatpush1.msra.mxu0 %v387
    %422 = vmatprep.subr.mxu0 0.0
    %423 = vmatpush1.msra.mxu0 %v388
    %424 = vmatprep.subr.mxu0 0.0
    %425 = vmatpush1.msra.mxu0 %v389
    %426 = vmatprep.subr.mxu0 0.0
    %427 = vmatpush1.msra.mxu0 %v390
    %428 = vmatprep.subr.mxu0 0.0
    %429 = vmatpush1.msra.mxu0 0.0
    %430 = vmatprep.subr.mxu0 0.0
    %431 = vmatpush1.msra.mxu0 0.0
    %432 = vmatprep.subr.mxu0 0.0
    %433 = vmatpush1.msra.mxu0 0.0
    %434 = vmatprep.subr.mxu0 0.0
    %435 = vmatpush1.msra.mxu0 0.0
    %436 = vmatprep.subr.mxu0 0.0
    %437 = vmatpush1.msra.mxu0 0.0
    %438 = vmatprep.subr.mxu0 0.0
    %439 = vmatpush1.msra.mxu0 0.0
    %440 = vmatprep.subr.mxu0 0.0
    %441 = vmatpush1.msra.mxu0 0.0
    %442 = vmatprep.subr.mxu0 0.0
    %443 = vmatpush1.msra.mxu0 0.0
    %444 = vmatprep.subr.mxu0 0.0
    %445 = vmatpush1.msra.mxu0 0.0
    %446 = vmatprep.subr.mxu0 0.0
    %447 = vmatpush1.msra.mxu0 0.0
    %448 = vmatprep.subr.mxu0 0.0
    %449 = vmatpush1.msra.mxu0 0.0
    %450 = vmatprep.subr.mxu0 0.0
    %451 = vmatpush1.msra.mxu0 0.0
    %452 = vmatprep.subr.mxu0 0.0
    %453 = vmatpush1.msra.mxu0 0.0
    %454 = vmatprep.subr.mxu0 0.0
    %455 = vmatpush1.msra.mxu0 0.0
    %456 = vmatprep.subr.mxu0 0.0
    %457 = vmatpush1.msra.mxu0 0.0
    %458 = vmatprep.subr.mxu0 0.0
    %459 = vmatpush1.msra.mxu0 0.0
    %460 = vmatprep.mubr.f32.mxu0 0.0
    %461 = vmatmul.mubr.f32.gmra.mrb[0].mxu0 %v374
    %v462 = vpop.f32.mrb[0].mxu0
    %v463 = vadd.f32 %v395, %v462
    %v464 = vpop.f32.mrb[0].mxu0
    %465 = vdwg.mxu0
    %466 = vst [vmem:[#allocation2] sm:$0xff] 0.0
    %468 = vrot.lane.b32.xlu0 %v144, 16
    %v469 = vpop.permute.xlu0 %468
    %vm471 = vcmask 392320
    %472 = vst.msk [vmem:[#allocation2] sm:$0xff] %vm471, %v469
    %474 = vrot.lane.b32.xlu0 %v198, 48
    %v475 = vpop.permute.xlu0 %474
    %vm477 = vcmask 654720
    %478 = vst.msk [vmem:[#allocation2] sm:$0xff] %vm477, %v475
    %480 = vrot.lane.b32.xlu0 %v182, 80
    %v481 = vpop.permute.xlu0 %480
    %vm483 = vcmask 917120
    %484 = vst.msk [vmem:[#allocation2] sm:$0xff] %vm483, %v481
    %vm485 = vcmask 130048
    %486 = vst.msk [vmem:[#allocation2] sm:$0xff] %vm485, %v463
    %v487 = vld [vmem:[#allocation2] sm:$0xff]
    %v488 = vld [vmem:[#allocation3 + $0x188] sm:$0xff]
    %v489 = vld [vmem:[#allocation3 + $0x190] sm:$0xff]
    %v490 = vld [vmem:[#allocation3 + $0x198] sm:$0xff]
    %v491 = vld [vmem:[#allocation3 + $0x1a0] sm:$0xff]
    %v492 = vld [vmem:[#allocation3 + $0x1a8] sm:$0xff]
    %v493 = vld [vmem:[#allocation3 + $0x1b0] sm:$0xff]
    %v494 = vld [vmem:[#allocation3 + $0x1b8] sm:$0xff]
    %v495 = vld [vmem:[#allocation3 + $0x1c0] sm:$0xff]
    %v496 = vld [vmem:[#allocation3 + $0x1c8] sm:$0xff]
    %v497 = vld [vmem:[#allocation3 + $0x1d0] sm:$0xff]
    %v498 = vld [vmem:[#allocation3 + $0x1d8] sm:$0xff]
    %v499 = vld [vmem:[#allocation3 + $0x1e0] sm:$0xff]
    %v500 = vld [vmem:[#allocation3 + $0x1e8] sm:$0xff]
    %v501 = vld [vmem:[#allocation3 + $0x1f0] sm:$0xff]
    %v502 = vld [vmem:[#allocation3 + $0x1f8] sm:$0xff]
    %v503 = vld [vmem:[#allocation3 + $0x200] sm:$0xff]
    %v504 = vld [vmem:[#allocation3 + $0x208] sm:$0x1]
    %v505 = vlaneseq
    %v506 = vshrl.u32 %v505, 7
    %v507 = vsub.s32 0, %v506
    %v508 = vrot.slane %v504, %v507
    %509 = vmatprep.subr.mxu0 0.0
    %510 = vmatpush1.msra.mxu0 %v488
    %511 = vmatprep.subr.mxu0 0.0
    %512 = vmatpush1.msra.mxu0 %v489
    %513 = vmatprep.subr.mxu0 0.0
    %514 = vmatpush1.msra.mxu0 %v490
    %515 = vmatprep.subr.mxu0 0.0
    %516 = vmatpush1.msra.mxu0 %v491
    %517 = vmatprep.subr.mxu0 0.0
    %518 = vmatpush1.msra.mxu0 %v492
    %519 = vmatprep.subr.mxu0 0.0
    %520 = vmatpush1.msra.mxu0 %v493
    %521 = vmatprep.subr.mxu0 0.0
    %522 = vmatpush1.msra.mxu0 %v494
    %523 = vmatprep.subr.mxu0 0.0
    %524 = vmatpush1.msra.mxu0 %v495
    %525 = vmatprep.subr.mxu0 0.0
    %526 = vmatpush1.msra.mxu0 %v496
    %527 = vmatprep.subr.mxu0 0.0
    %528 = vmatpush1.msra.mxu0 %v497
    %529 = vmatprep.subr.mxu0 0.0
    %530 = vmatpush1.msra.mxu0 %v498
    %531 = vmatprep.subr.mxu0 0.0
    %532 = vmatpush1.msra.mxu0 %v499
    %533 = vmatprep.subr.mxu0 0.0
    %534 = vmatpush1.msra.mxu0 %v500
    %535 = vmatprep.subr.mxu0 0.0
    %536 = vmatpush1.msra.mxu0 %v501
    %537 = vmatprep.subr.mxu0 0.0
    %538 = vmatpush1.msra.mxu0 %v502
    %539 = vmatprep.subr.mxu0 0.0
    %540 = vmatpush1.msra.mxu0 %v503
    %541 = vmatprep.subr.mxu0 0.0
    %542 = vmatpush1.msra.mxu0 0.0
    %543 = vmatprep.subr.mxu0 0.0
    %544 = vmatpush1.msra.mxu0 0.0
    %545 = vmatprep.subr.mxu0 0.0
    %546 = vmatpush1.msra.mxu0 0.0
    %547 = vmatprep.subr.mxu0 0.0
    %548 = vmatpush1.msra.mxu0 0.0
    %549 = vmatprep.subr.mxu0 0.0
    %550 = vmatpush1.msra.mxu0 0.0
    %551 = vmatprep.subr.mxu0 0.0
    %552 = vmatpush1.msra.mxu0 0.0
    %553 = vmatprep.subr.mxu0 0.0
    %554 = vmatpush1.msra.mxu0 0.0
    %555 = vmatprep.subr.mxu0 0.0
    %556 = vmatpush1.msra.mxu0 0.0
    %557 = vmatprep.subr.mxu0 0.0
    %558 = vmatpush1.msra.mxu0 0.0
    %559 = vmatprep.subr.mxu0 0.0
    %560 = vmatpush1.msra.mxu0 0.0
    %561 = vmatprep.subr.mxu0 0.0
    %562 = vmatpush1.msra.mxu0 0.0
    %563 = vmatprep.subr.mxu0 0.0
    %564 = vmatpush1.msra.mxu0 0.0
    %565 = vmatprep.subr.mxu0 0.0
    %566 = vmatpush1.msra.mxu0 0.0
    %567 = vmatprep.subr.mxu0 0.0
    %568 = vmatpush1.msra.mxu0 0.0
    %569 = vmatprep.subr.mxu0 0.0
    %570 = vmatpush1.msra.mxu0 0.0
    %571 = vmatprep.subr.mxu0 0.0
    %572 = vmatpush1.msra.mxu0 0.0
    %573 = vmatprep.mubr.f32.mxu0 0.0
    %574 = vmatmul.mubr.f32.gmra.mrb[0].mxu0 %v487
    %v575 = vpop.f32.mrb[0].mxu0
    %v576 = vadd.f32 %v508, %v575
    %v577 = vpop.f32.mrb[0].mxu0
    %578 = vdwg.mxu0
    %v579 = vmax.f32 %v576, 0.0
    %v580 = vld [vmem:[#allocation3 + $0x210] sm:$0xff]
    %v581 = vld [vmem:[#allocation3 + $0x218] sm:$0xff]
    %v582 = vld [vmem:[#allocation3 + $0x220] sm:$0xff]
    %v583 = vld [vmem:[#allocation3 + $0x228] sm:$0xff]
    %v584 = vld [vmem:[#allocation3 + $0x230] sm:$0xff]
    %v585 = vld [vmem:[#allocation3 + $0x238] sm:$0xff]
    %v586 = vld [vmem:[#allocation3 + $0x240] sm:$0xff]
    %v587 = vld [vmem:[#allocation3 + $0x248] sm:$0xff]
    %v588 = vld [vmem:[#allocation3 + $0x250] sm:$0x1]
    %v589 = vlaneseq
    %v590 = vshrl.u32 %v589, 7
    %v591 = vsub.s32 0, %v590
    %v592 = vrot.slane %v588, %v591
    %vm593 = vcmask 523264
    %v595 = vsel %vm593, %v579, 0
    %597 = vmatprep.subr.mxu0 0.0
    %598 = vmatpush1.msra.mxu0 %v580
    %599 = vmatprep.subr.mxu0 0.0
    %600 = vmatpush1.msra.mxu0 %v581
    %601 = vmatprep.subr.mxu0 0.0
    %602 = vmatpush1.msra.mxu0 %v582
    %603 = vmatprep.subr.mxu0 0.0
    %604 = vmatpush1.msra.mxu0 %v583
    %605 = vmatprep.subr.mxu0 0.0
    %606 = vmatpush1.msra.mxu0 %v584
    %607 = vmatprep.subr.mxu0 0.0
    %608 = vmatpush1.msra.mxu0 %v585
    %609 = vmatprep.subr.mxu0 0.0
    %610 = vmatpush1.msra.mxu0 %v586
    %611 = vmatprep.subr.mxu0 0.0
    %612 = vmatpush1.msra.mxu0 %v587
    %613 = vmatprep.subr.mxu0 0.0
    %614 = vmatpush1.msra.mxu0 0.0
    %615 = vmatprep.subr.mxu0 0.0
    %616 = vmatpush1.msra.mxu0 0.0
    %617 = vmatprep.subr.mxu0 0.0
    %618 = vmatpush1.msra.mxu0 0.0
    %619 = vmatprep.subr.mxu0 0.0
    %620 = vmatpush1.msra.mxu0 0.0
    %621 = vmatprep.subr.mxu0 0.0
    %622 = vmatpush1.msra.mxu0 0.0
    %623 = vmatprep.subr.mxu0 0.0
    %624 = vmatpush1.msra.mxu0 0.0
    %625 = vmatprep.subr.mxu0 0.0
    %626 = vmatpush1.msra.mxu0 0.0
    %627 = vmatprep.subr.mxu0 0.0
    %628 = vmatpush1.msra.mxu0 0.0
    %629 = vmatprep.subr.mxu0 0.0
    %630 = vmatpush1.msra.mxu0 0.0
    %631 = vmatprep.subr.mxu0 0.0
    %632 = vmatpush1.msra.mxu0 0.0
    %633 = vmatprep.subr.mxu0 0.0
    %634 = vmatpush1.msra.mxu0 0.0
    %635 = vmatprep.subr.mxu0 0.0
    %636 = vmatpush1.msra.mxu0 0.0
    %637 = vmatprep.subr.mxu0 0.0
    %638 = vmatpush1.msra.mxu0 0.0
    %639 = vmatprep.subr.mxu0 0.0
    %640 = vmatpush1.msra.mxu0 0.0
    %641 = vmatprep.subr.mxu0 0.0
    %642 = vmatpush1.msra.mxu0 0.0
    %643 = vmatprep.subr.mxu0 0.0
    %644 = vmatpush1.msra.mxu0 0.0
    %645 = vmatprep.subr.mxu0 0.0
    %646 = vmatpush1.msra.mxu0 0.0
    %647 = vmatprep.subr.mxu0 0.0
    %648 = vmatpush1.msra.mxu0 0.0
    %649 = vmatprep.subr.mxu0 0.0
    %650 = vmatpush1.msra.mxu0 0.0
    %651 = vmatprep.subr.mxu0 0.0
    %652 = vmatpush1.msra.mxu0 0.0
    %653 = vmatprep.subr.mxu0 0.0
    %654 = vmatpush1.msra.mxu0 0.0
    %655 = vmatprep.subr.mxu0 0.0
    %656 = vmatpush1.msra.mxu0 0.0
    %657 = vmatprep.subr.mxu0 0.0
    %658 = vmatpush1.msra.mxu0 0.0
    %659 = vmatprep.subr.mxu0 0.0
    %660 = vmatpush1.msra.mxu0 0.0
    %661 = vmatprep.mubr.f32.mxu0 0.0
    %662 = vmatmul.mubr.f32.gmra.mrb[0].mxu0 %v595
    %v663 = vpop.f32.mrb[0].mxu0
    %v664 = vadd.f32 %v592, %v663
    %v665 = vpop.f32.mrb[0].mxu0
    %666 = vdwg.mxu0
    %v667 = vmax.f32 %v664, 0.0
    %v668 = vld [vmem:[#allocation3 + $0x258] sm:$0xff]
    %v669 = vld [vmem:[#allocation3 + $0x260] sm:$0xff]
    %v670 = vld [vmem:[#allocation3 + $0x268] sm:$0xff]
    %v671 = vld [vmem:[#allocation3 + $0x270] sm:$0xff]
    %v672 = vld [vmem:[#allocation3 + $0x278] sm:$0xff]
    %v673 = vld [vmem:[#allocation3 + $0x280] sm:$0xff]
    %v674 = vld [vmem:[#allocation3 + $0x288] sm:$0xff]
    %v675 = vld [vmem:[#allocation3 + $0x290] sm:$0xff]
    %v676 = vld [vmem:[#allocation3 + $0x298] sm:$0x1]
    %v677 = vlaneseq
    %v678 = vshrl.u32 %v677, 7
    %v679 = vsub.s32 0, %v678
    %v680 = vrot.slane %v676, %v679
    %v682 = vsel %vm593, %v667, 0
    %684 = vmatprep.subr.mxu0 0.0
    %685 = vmatpush1.msra.mxu0 %v668
    %686 = vmatprep.subr.mxu0 0.0
    %687 = vmatpush1.msra.mxu0 %v669
    %688 = vmatprep.subr.mxu0 0.0
    %689 = vmatpush1.msra.mxu0 %v670
    %690 = vmatprep.subr.mxu0 0.0
    %691 = vmatpush1.msra.mxu0 %v671
    %692 = vmatprep.subr.mxu0 0.0
    %693 = vmatpush1.msra.mxu0 %v672
    %694 = vmatprep.subr.mxu0 0.0
    %695 = vmatpush1.msra.mxu0 %v673
    %696 = vmatprep.subr.mxu0 0.0
    %697 = vmatpush1.msra.mxu0 %v674
    %698 = vmatprep.subr.mxu0 0.0
    %699 = vmatpush1.msra.mxu0 %v675
    %700 = vmatprep.subr.mxu0 0.0
    %701 = vmatpush1.msra.mxu0 0.0
    %702 = vmatprep.subr.mxu0 0.0
    %703 = vmatpush1.msra.mxu0 0.0
    %704 = vmatprep.subr.mxu0 0.0
    %705 = vmatpush1.msra.mxu0 0.0
    %706 = vmatprep.subr.mxu0 0.0
    %707 = vmatpush1.msra.mxu0 0.0
    %708 = vmatprep.subr.mxu0 0.0
    %709 = vmatpush1.msra.mxu0 0.0
    %710 = vmatprep.subr.mxu0 0.0
    %711 = vmatpush1.msra.mxu0 0.0
    %712 = vmatprep.subr.mxu0 0.0
    %713 = vmatpush1.msra.mxu0 0.0
    %714 = vmatprep.subr.mxu0 0.0
    %715 = vmatpush1.msra.mxu0 0.0
    %716 = vmatprep.subr.mxu0 0.0
    %717 = vmatpush1.msra.mxu0 0.0
    %718 = vmatprep.subr.mxu0 0.0
    %719 = vmatpush1.msra.mxu0 0.0
    %720 = vmatprep.subr.mxu0 0.0
    %721 = vmatpush1.msra.mxu0 0.0
    %722 = vmatprep.subr.mxu0 0.0
    %723 = vmatpush1.msra.mxu0 0.0
    %724 = vmatprep.subr.mxu0 0.0
    %725 = vmatpush1.msra.mxu0 0.0
    %726 = vmatprep.subr.mxu0 0.0
    %727 = vmatpush1.msra.mxu0 0.0
    %728 = vmatprep.subr.mxu0 0.0
    %729 = vmatpush1.msra.mxu0 0.0
    %730 = vmatprep.subr.mxu0 0.0
    %731 = vmatpush1.msra.mxu0 0.0
    %732 = vmatprep.subr.mxu0 0.0
    %733 = vmatpush1.msra.mxu0 0.0
    %734 = vmatprep.subr.mxu0 0.0
    %735 = vmatpush1.msra.mxu0 0.0
    %736 = vmatprep.subr.mxu0 0.0
    %737 = vmatpush1.msra.mxu0 0.0
    %738 = vmatprep.subr.mxu0 0.0
    %739 = vmatpush1.msra.mxu0 0.0
    %740 = vmatprep.subr.mxu0 0.0
    %741 = vmatpush1.msra.mxu0 0.0
    %742 = vmatprep.subr.mxu0 0.0
    %743 = vmatpush1.msra.mxu0 0.0
    %744 = vmatprep.subr.mxu0 0.0
    %745 = vmatpush1.msra.mxu0 0.0
    %746 = vmatprep.subr.mxu0 0.0
    %747 = vmatpush1.msra.mxu0 0.0
    %748 = vmatprep.mubr.f32.mxu0 0.0
    %749 = vmatmul.mubr.f32.gmra.mrb[0].mxu0 %v682
    %v750 = vpop.f32.mrb[0].mxu0
    %v751 = vadd.f32 %v680, %v750
    %v752 = vpop.f32.mrb[0].mxu0
    %753 = vdwg.mxu0
    %v754 = vmul.f32 %v751, 0.5
    %v755 = vmul.f32 %v754, 1.442695
    %v756 = vpow.pop %v755
    %758 = vrot.lane.b32.xlu0 %v756, 112
    %v759 = vpop.permute.xlu0 %758
    %v761 = vmul.f32 %v25, %v759
    %v762 = vadd.f32 %v751, %v761
    %764 = vrot.lane.b32.xlu0 %v762, 104
    %v765 = vpop.permute.xlu0 %764
    %767 = vst.msk [vmem:[#allocation2] sm:$0xff] %vm485, %v765
    %v768 = vld [vmem:[#allocation2] sm:$0xff]
    %v769 = vld [vmem:[#allocation3 + $0x2a0] sm:$0xff]
    %v770 = vld [vmem:[#allocation3 + $0x2a8] sm:$0xff]
    %v771 = vld [vmem:[#allocation3 + $0x2b0] sm:$0xff]
    %v772 = vld [vmem:[#allocation3 + $0x2b8] sm:$0xff]
    %v773 = vld [vmem:[#allocation3 + $0x2c0] sm:$0xff]
    %v774 = vld [vmem:[#allocation3 + $0x2c8] sm:$0xff]
    %v775 = vld [vmem:[#allocation3 + $0x2d0] sm:$0xff]
    %v776 = vld [vmem:[#allocation3 + $0x2d8] sm:$0xff]
    %v777 = vld [vmem:[#allocation3 + $0x2e0] sm:$0xff]
    %v778 = vld [vmem:[#allocation3 + $0x2e8] sm:$0xff]
    %v779 = vld [vmem:[#allocation3 + $0x2f0] sm:$0xff]
    %v780 = vld [vmem:[#allocation3 + $0x2f8] sm:$0xff]
    %v781 = vld [vmem:[#allocation3 + $0x300] sm:$0xff]
    %v782 = vld [vmem:[#allocation3 + $0x308] sm:$0xff]
    %v783 = vld [vmem:[#allocation3 + $0x310] sm:$0xff]
    %v784 = vld [vmem:[#allocation3 + $0x318] sm:$0xff]
    %v785 = vld [vmem:[#allocation3 + $0x320] sm:$0x1]
    %v786 = vlaneseq
    %v787 = vshrl.u32 %v786, 7
    %v788 = vsub.s32 0, %v787
    %v789 = vrot.slane %v785, %v788
    %790 = vmatprep.subr.mxu0 0.0
    %791 = vmatpush1.msra.mxu0 %v769
    %792 = vmatprep.subr.mxu0 0.0
    %793 = vmatpush1.msra.mxu0 %v770
    %794 = vmatprep.subr.mxu0 0.0
    %795 = vmatpush1.msra.mxu0 %v771
    %796 = vmatprep.subr.mxu0 0.0
    %797 = vmatpush1.msra.mxu0 %v772
    %798 = vmatprep.subr.mxu0 0.0
    %799 = vmatpush1.msra.mxu0 %v773
    %800 = vmatprep.subr.mxu0 0.0
    %801 = vmatpush1.msra.mxu0 %v774
    %802 = vmatprep.subr.mxu0 0.0
    %803 = vmatpush1.msra.mxu0 %v775
    %804 = vmatprep.subr.mxu0 0.0
    %805 = vmatpush1.msra.mxu0 %v776
    %806 = vmatprep.subr.mxu0 0.0
    %807 = vmatpush1.msra.mxu0 %v777
    %808 = vmatprep.subr.mxu0 0.0
    %809 = vmatpush1.msra.mxu0 %v778
    %810 = vmatprep.subr.mxu0 0.0
    %811 = vmatpush1.msra.mxu0 %v779
    %812 = vmatprep.subr.mxu0 0.0
    %813 = vmatpush1.msra.mxu0 %v780
    %814 = vmatprep.subr.mxu0 0.0
    %815 = vmatpush1.msra.mxu0 %v781
    %816 = vmatprep.subr.mxu0 0.0
    %817 = vmatpush1.msra.mxu0 %v782
    %818 = vmatprep.subr.mxu0 0.0
    %819 = vmatpush1.msra.mxu0 %v783
    %820 = vmatprep.subr.mxu0 0.0
    %821 = vmatpush1.msra.mxu0 %v784
    %822 = vmatprep.subr.mxu0 0.0
    %823 = vmatpush1.msra.mxu0 0.0
    %824 = vmatprep.subr.mxu0 0.0
    %825 = vmatpush1.msra.mxu0 0.0
    %826 = vmatprep.subr.mxu0 0.0
    %827 = vmatpush1.msra.mxu0 0.0
    %828 = vmatprep.subr.mxu0 0.0
    %829 = vmatpush1.msra.mxu0 0.0
    %830 = vmatprep.subr.mxu0 0.0
    %831 = vmatpush1.msra.mxu0 0.0
    %832 = vmatprep.subr.mxu0 0.0
    %833 = vmatpush1.msra.mxu0 0.0
    %834 = vmatprep.subr.mxu0 0.0
    %835 = vmatpush1.msra.mxu0 0.0
    %836 = vmatprep.subr.mxu0 0.0
    %837 = vmatpush1.msra.mxu0 0.0
    %838 = vmatprep.subr.mxu0 0.0
    %839 = vmatpush1.msra.mxu0 0.0
    %840 = vmatprep.subr.mxu0 0.0
    %841 = vmatpush1.msra.mxu0 0.0
    %842 = vmatprep.subr.mxu0 0.0
    %843 = vmatpush1.msra.mxu0 0.0
    %844 = vmatprep.subr.mxu0 0.0
    %845 = vmatpush1.msra.mxu0 0.0
    %846 = vmatprep.subr.mxu0 0.0
    %847 = vmatpush1.msra.mxu0 0.0
    %848 = vmatprep.subr.mxu0 0.0
    %849 = vmatpush1.msra.mxu0 0.0
    %850 = vmatprep.subr.mxu0 0.0
    %851 = vmatpush1.msra.mxu0 0.0
    %852 = vmatprep.subr.mxu0 0.0
    %853 = vmatpush1.msra.mxu0 0.0
    %854 = vmatprep.mubr.f32.mxu0 0.0
    %855 = vmatmul.mubr.f32.gmra.mrb[0].mxu0 %v768
    %v856 = vpop.f32.mrb[0].mxu0
    %v857 = vadd.f32 %v789, %v856
    %v858 = vpop.f32.mrb[0].mxu0
    %859 = vdwg.mxu0
    %v860 = vmax.f32 %v857, 0.0
    %v861 = vld [vmem:[#allocation3 + $0x328] sm:$0xff]
    %v862 = vld [vmem:[#allocation3 + $0x330] sm:$0xff]
    %v863 = vld [vmem:[#allocation3 + $0x338] sm:$0xff]
    %v864 = vld [vmem:[#allocation3 + $0x340] sm:$0xff]
    %v865 = vld [vmem:[#allocation3 + $0x348] sm:$0xff]
    %v866 = vld [vmem:[#allocation3 + $0x350] sm:$0xff]
    %v867 = vld [vmem:[#allocation3 + $0x358] sm:$0xff]
    %v868 = vld [vmem:[#allocation3 + $0x360] sm:$0xff]
    %v869 = vld [vmem:[#allocation3 + $0x368] sm:$0x1]
    %v870 = vlaneseq
    %v871 = vshrl.u32 %v870, 7
    %v872 = vsub.s32 0, %v871
    %v873 = vrot.slane %v869, %v872
    %v875 = vsel %vm593, %v860, 0
    %877 = vmatprep.subr.mxu0 0.0
    %878 = vmatpush1.msra.mxu0 %v861
    %879 = vmatprep.subr.mxu0 0.0
    %880 = vmatpush1.msra.mxu0 %v862
    %881 = vmatprep.subr.mxu0 0.0
    %882 = vmatpush1.msra.mxu0 %v863
    %883 = vmatprep.subr.mxu0 0.0
    %884 = vmatpush1.msra.mxu0 %v864
    %885 = vmatprep.subr.mxu0 0.0
    %886 = vmatpush1.msra.mxu0 %v865
    %887 = vmatprep.subr.mxu0 0.0
    %888 = vmatpush1.msra.mxu0 %v866
    %889 = vmatprep.subr.mxu0 0.0
    %890 = vmatpush1.msra.mxu0 %v867
    %891 = vmatprep.subr.mxu0 0.0
    %892 = vmatpush1.msra.mxu0 %v868
    %893 = vmatprep.subr.mxu0 0.0
    %894 = vmatpush1.msra.mxu0 0.0
    %895 = vmatprep.subr.mxu0 0.0
    %896 = vmatpush1.msra.mxu0 0.0
    %897 = vmatprep.subr.mxu0 0.0
    %898 = vmatpush1.msra.mxu0 0.0
    %899 = vmatprep.subr.mxu0 0.0
    %900 = vmatpush1.msra.mxu0 0.0
    %901 = vmatprep.subr.mxu0 0.0
    %902 = vmatpush1.msra.mxu0 0.0
    %903 = vmatprep.subr.mxu0 0.0
    %904 = vmatpush1.msra.mxu0 0.0
    %905 = vmatprep.subr.mxu0 0.0
    %906 = vmatpush1.msra.mxu0 0.0
    %907 = vmatprep.subr.mxu0 0.0
    %908 = vmatpush1.msra.mxu0 0.0
    %909 = vmatprep.subr.mxu0 0.0
    %910 = vmatpush1.msra.mxu0 0.0
    %911 = vmatprep.subr.mxu0 0.0
    %912 = vmatpush1.msra.mxu0 0.0
    %913 = vmatprep.subr.mxu0 0.0
    %914 = vmatpush1.msra.mxu0 0.0
    %915 = vmatprep.subr.mxu0 0.0
    %916 = vmatpush1.msra.mxu0 0.0
    %917 = vmatprep.subr.mxu0 0.0
    %918 = vmatpush1.msra.mxu0 0.0
    %919 = vmatprep.subr.mxu0 0.0
    %920 = vmatpush1.msra.mxu0 0.0
    %921 = vmatprep.subr.mxu0 0.0
    %922 = vmatpush1.msra.mxu0 0.0
    %923 = vmatprep.subr.mxu0 0.0
    %924 = vmatpush1.msra.mxu0 0.0
    %925 = vmatprep.subr.mxu0 0.0
    %926 = vmatpush1.msra.mxu0 0.0
    %927 = vmatprep.subr.mxu0 0.0
    %928 = vmatpush1.msra.mxu0 0.0
    %929 = vmatprep.subr.mxu0 0.0
    %930 = vmatpush1.msra.mxu0 0.0
    %931 = vmatprep.subr.mxu0 0.0
    %932 = vmatpush1.msra.mxu0 0.0
    %933 = vmatprep.subr.mxu0 0.0
    %934 = vmatpush1.msra.mxu0 0.0
    %935 = vmatprep.subr.mxu0 0.0
    %936 = vmatpush1.msra.mxu0 0.0
    %937 = vmatprep.subr.mxu0 0.0
    %938 = vmatpush1.msra.mxu0 0.0
    %939 = vmatprep.subr.mxu0 0.0
    %940 = vmatpush1.msra.mxu0 0.0
    %941 = vmatprep.mubr.f32.mxu0 0.0
    %942 = vmatmul.mubr.f32.gmra.mrb[0].mxu0 %v875
    %v943 = vpop.f32.mrb[0].mxu0
    %v944 = vadd.f32 %v873, %v943
    %v945 = vpop.f32.mrb[0].mxu0
    %946 = vdwg.mxu0
    %v947 = vmax.f32 %v944, 0.0
    %v948 = vld [vmem:[#allocation3 + $0x370] sm:$0xff]
    %v949 = vld [vmem:[#allocation3 + $0x378] sm:$0xff]
    %v950 = vld [vmem:[#allocation3 + $0x380] sm:$0xff]
    %v951 = vld [vmem:[#allocation3 + $0x388] sm:$0xff]
    %v952 = vld [vmem:[#allocation3 + $0x390] sm:$0xff]
    %v953 = vld [vmem:[#allocation3 + $0x398] sm:$0xff]
    %v954 = vld [vmem:[#allocation3 + $0x3a0] sm:$0xff]
    %v955 = vld [vmem:[#allocation3 + $0x3a8] sm:$0xff]
    %v956 = vld [vmem:[#allocation3 + $0x3b0] sm:$0x1]
    %v957 = vlaneseq
    %v958 = vshrl.u32 %v957, 7
    %v959 = vsub.s32 0, %v958
    %v960 = vrot.slane %v956, %v959
    %v962 = vsel %vm593, %v947, 0
    %964 = vmatprep.subr.mxu0 0.0
    %965 = vmatpush1.msra.mxu0 %v948
    %966 = vmatprep.subr.mxu0 0.0
    %967 = vmatpush1.msra.mxu0 %v949
    %968 = vmatprep.subr.mxu0 0.0
    %969 = vmatpush1.msra.mxu0 %v950
    %970 = vmatprep.subr.mxu0 0.0
    %971 = vmatpush1.msra.mxu0 %v951
    %972 = vmatprep.subr.mxu0 0.0
    %973 = vmatpush1.msra.mxu0 %v952
    %974 = vmatprep.subr.mxu0 0.0
    %975 = vmatpush1.msra.mxu0 %v953
    %976 = vmatprep.subr.mxu0 0.0
    %977 = vmatpush1.msra.mxu0 %v954
    %978 = vmatprep.subr.mxu0 0.0
    %979 = vmatpush1.msra.mxu0 %v955
    %980 = vmatprep.subr.mxu0 0.0
    %981 = vmatpush1.msra.mxu0 0.0
    %982 = vmatprep.subr.mxu0 0.0
    %983 = vmatpush1.msra.mxu0 0.0
    %984 = vmatprep.subr.mxu0 0.0
    %985 = vmatpush1.msra.mxu0 0.0
    %986 = vmatprep.subr.mxu0 0.0
    %987 = vmatpush1.msra.mxu0 0.0
    %988 = vmatprep.subr.mxu0 0.0
    %989 = vmatpush1.msra.mxu0 0.0
    %990 = vmatprep.subr.mxu0 0.0
    %991 = vmatpush1.msra.mxu0 0.0
    %992 = vmatprep.subr.mxu0 0.0
    %993 = vmatpush1.msra.mxu0 0.0
    %994 = vmatprep.subr.mxu0 0.0
    %995 = vmatpush1.msra.mxu0 0.0
    %996 = vmatprep.subr.mxu0 0.0
    %997 = vmatpush1.msra.mxu0 0.0
    %998 = vmatprep.subr.mxu0 0.0
    %999 = vmatpush1.msra.mxu0 0.0
    %1000 = vmatprep.subr.mxu0 0.0
    %1001 = vmatpush1.msra.mxu0 0.0
    %1002 = vmatprep.subr.mxu0 0.0
    %1003 = vmatpush1.msra.mxu0 0.0
    %1004 = vmatprep.subr.mxu0 0.0
    %1005 = vmatpush1.msra.mxu0 0.0
    %1006 = vmatprep.subr.mxu0 0.0
    %1007 = vmatpush1.msra.mxu0 0.0
    %1008 = vmatprep.subr.mxu0 0.0
    %1009 = vmatpush1.msra.mxu0 0.0
    %1010 = vmatprep.subr.mxu0 0.0
    %1011 = vmatpush1.msra.mxu0 0.0
    %1012 = vmatprep.subr.mxu0 0.0
    %1013 = vmatpush1.msra.mxu0 0.0
    %1014 = vmatprep.subr.mxu0 0.0
    %1015 = vmatpush1.msra.mxu0 0.0
    %1016 = vmatprep.subr.mxu0 0.0
    %1017 = vmatpush1.msra.mxu0 0.0
    %1018 = vmatprep.subr.mxu0 0.0
    %1019 = vmatpush1.msra.mxu0 0.0
    %1020 = vmatprep.subr.mxu0 0.0
    %1021 = vmatpush1.msra.mxu0 0.0
    %1022 = vmatprep.subr.mxu0 0.0
    %1023 = vmatpush1.msra.mxu0 0.0
    %1024 = vmatprep.subr.mxu0 0.0
    %1025 = vmatpush1.msra.mxu0 0.0
    %1026 = vmatprep.subr.mxu0 0.0
    %1027 = vmatpush1.msra.mxu0 0.0
    %1028 = vmatprep.mubr.f32.mxu0 0.0
    %1029 = vmatmul.mubr.f32.gmra.mrb[0].mxu0 %v962
    %v1030 = vpop.f32.mrb[0].mxu0
    %v1031 = vadd.f32 %v960, %v1030
    %v1032 = vpop.f32.mrb[0].mxu0
    %1033 = vdwg.mxu0
    %v1034 = vadd.f32 %v1031, %v751
    %1035 = vst [vmem:[%s2] sm:$0xff] %v1034
    // Predicated region
    $region14: #{traj_proposal_forward.1} parent=1 // pred_check
      _
    $region15: #{traj_proposal_forward.1} parent=1 // pred_check_branch
      %1037 = sbr.rel (0) target = $region17
    $region16: #{traj_proposal_forward.1} parent=1 // pred_region
      _
    $region17: #{traj_proposal_forward.1} parent=1 // pred_fallthru
      _
    // Predicated region
    $region18: #{traj_proposal_forward.1} parent=1 // pred_check
      _
    $region19: #{traj_proposal_forward.1} parent=1 // pred_check_branch
      %1039 = sbr.rel (0) target = $region21
    $region20: #{traj_proposal_forward.1} parent=1 // pred_region
      _
    $region21: #{traj_proposal_forward.1} parent=1 // pred_fallthru
      _
    %1040 = vsyncpa [#allocation4], 1

</llo_original>
